<compile_context>
chip_gen: v7x
topology: tpu7x:2x2x1
jax: 0.10.0
libtpu: 0.0.40
codegen_flags: <defaults>
</compile_context>

<pallas_src>
import functools

import jax
import jax.numpy as jnp
from jax.experimental import pallas as pl
from jax.experimental.pallas import tpu as pltpu

# ---------------------------------------------------------------------------
# Module dimensions (from the PyTorch spec) and layout constants.
# ---------------------------------------------------------------------------
H1, H2, OUT = 1200, 120, 10

STREAM_DTYPE = jnp.bfloat16   # streamed operands (x, w1); accumulation stays f32
_LANE = 128
_SUBLANE = 16                 # bf16 packs 16 rows / vreg -> pad M to 16-multiples
_TILE_M_MAX = 256             # max batch tile; M grid axis is marked "parallel"


def _round_up(n, mult):
    return -(-n // mult) * mult


def _pad2d(a, rows, cols):
    return jnp.pad(a, ((0, rows - a.shape[0]), (0, cols - a.shape[1])))


# ---------------------------------------------------------------------------
# VMEM budgeting / K-tile planning (generation- and dtype-aware)
# ---------------------------------------------------------------------------
def _vmem_capacity_bytes(fallback=64 << 20):
    """Physical VMEM per core; conservative 64 MiB (v7x) fallback."""
    try:
        info = pltpu.get_tpu_info()
        return int(getattr(info, "vmem_capacity_bytes", fallback))
    except Exception:
        return fallback


def _fused_vmem_need(tile_m, tk, h1p, h2p, outp, stream_itemsize):
    """VMEM footprint of one grid step."""
    streamed = 2 * (tile_m * tk + tk * h1p) * stream_itemsize        # x, w1 (2x buffered)
    resident = 2 * (h1p + h1p * h2p + h2p + h2p * outp + outp) * 4   # b1,w2,b2,w3,b3 (f32)
    out_b = 2 * tile_m * outp * 4                                    # output block
    acc = tile_m * h1p * 4                                           # f32 accumulator
    return streamed + resident + out_b + acc


def _plan_k(k_features, h1p, h2p, outp, *, stream_itemsize, target_tk=8192):
    """Pick the K tile (multiple of 128) and padded K so Kp % tk == 0."""
    budget = max(_vmem_capacity_bytes() - (24 << 20), 16 << 20)

    def fits(tk):
        return _fused_vmem_need(_TILE_M_MAX, tk, h1p, h2p, outp,
                                stream_itemsize) <= budget

    k128 = _round_up(k_features, _LANE)
    if k128 <= target_tk and fits(k128):
        return k128, k128                       # single K step
    tk = target_tk
    while tk > _LANE and not fits(tk):
        tk //= 2
    if not fits(tk):
        raise ValueError("w1 K tile does not fit in VMEM even at tk=128")
    return tk, _round_up(k_features, tk)


# ---------------------------------------------------------------------------
# Fused kernel: K-tiled layer-1 accumulation + layer-2/3 epilogue
# ---------------------------------------------------------------------------
def _decoder_fused_kernel(x_ref, w1_ref, b1_ref, w2_ref, b2_ref, w3_ref, b3_ref,
                          o_ref, acc_ref):
    k = pl.program_id(1)

    @pl.when(k == 0)
    def _():
        acc_ref[...] = jnp.zeros_like(acc_ref)

    # bf16 x bf16 -> f32 on the MXU, accumulated in the f32 VMEM scratch.
    acc_ref[...] += jnp.dot(x_ref[...], w1_ref[...],
                            preferred_element_type=jnp.float32)

    @pl.when(k == pl.num_programs(1) - 1)
    def _():
        h1 = jnp.maximum(acc_ref[...] + b1_ref[...], 0.0)
        h2 = jnp.maximum(
            jnp.dot(h1, w2_ref[...], preferred_element_type=jnp.float32)
            + b2_ref[...], 0.0)
        y = jnp.dot(h2, w3_ref[...], preferred_element_type=jnp.float32) + b3_ref[...]
        o_ref[...] = y.astype(o_ref.dtype)


# ---------------------------------------------------------------------------
# pallas_call wrapper
# ---------------------------------------------------------------------------
@functools.partial(jax.jit, static_argnames=("tk",))
def _run_fused(x2d, w1, b1, w2, b2, w3, b3, *, tk):
    Mp, Kp = x2d.shape
    H1p, H2p, Np = w1.shape[1], w2.shape[1], w3.shape[1]
    tile_m = Mp if Mp <= _TILE_M_MAX else _TILE_M_MAX
    assert Mp % tile_m == 0 and Kp % tk == 0
    nm, nk = Mp // tile_m, Kp // tk

    need = _fused_vmem_need(tile_m, tk, H1p, H2p, Np, x2d.dtype.itemsize)
    cap = _vmem_capacity_bytes()
    vmem_limit = int(min(max(need + (8 << 20), 16 << 20), cap))
    assert need <= vmem_limit, "VMEM footprint exceeds device capacity"

    in_specs = [
        pl.BlockSpec((tile_m, tk), lambda i, k: (i, k)),   # x   (streamed, bf16)
        pl.BlockSpec((tk, H1p), lambda i, k: (k, 0)),      # w1  (streamed, bf16)
        pl.BlockSpec((1, H1p), lambda i, k: (0, 0)),       # b1  (resident)
        pl.BlockSpec((H1p, H2p), lambda i, k: (0, 0)),     # w2  (resident, ~0.6 MB)
        pl.BlockSpec((1, H2p), lambda i, k: (0, 0)),       # b2  (resident)
        pl.BlockSpec((H2p, Np), lambda i, k: (0, 0)),      # w3  (resident)
        pl.BlockSpec((1, Np), lambda i, k: (0, 0)),        # b3  (resident)
    ]
    out_spec = pl.BlockSpec((tile_m, Np), lambda i, k: (i, 0))  # resident across k

    return pl.pallas_call(
        _decoder_fused_kernel,
        out_shape=jax.ShapeDtypeStruct((Mp, Np), jnp.float32),
        grid_spec=pltpu.PrefetchScalarGridSpec(
            num_scalar_prefetch=0,
            grid=(nm, nk),
            in_specs=in_specs,
            out_specs=out_spec,
            scratch_shapes=[pltpu.VMEM((tile_m, H1p), jnp.float32)],
        ),
        compiler_params=pltpu.CompilerParams(
            dimension_semantics=("parallel", "arbitrary"),  # M parallel, K reduction
            vmem_limit_bytes=vmem_limit,
        ),
    )(x2d, w1, b1, w2, b2, w3, b3)


# ---------------------------------------------------------------------------
# One-time preparation (outside the hot path)
# ---------------------------------------------------------------------------
def prepare_decoder_fc_params(params, *, stream_dtype=STREAM_DTYPE, target_tk=8192):
    """Pad to lane multiples, pad K to a K-tile multiple, cast streamed w1 to bf16.

    Zero padding is numerically exact: padded h1/h2 lanes come out as
    relu(0 + 0) = 0 and only hit zero-padded weight rows downstream; padded K
    columns multiply zero x columns.
    """
    k_feat, h1 = params["w1"].shape
    h2, out = params["w2"].shape[1], params["w3"].shape[1]
    h1p, h2p, outp = (_round_up(d, _LANE) for d in (h1, h2, out))
    tk, kp = _plan_k(k_feat, h1p, h2p, outp,
                     stream_itemsize=jnp.dtype(stream_dtype).itemsize,
                     target_tk=target_tk)
    return {
        "w1": _pad2d(params["w1"].astype(stream_dtype), kp, h1p),
        "b1": _pad2d(params["b1"].reshape(1, -1), 1, h1p),
        "w2": _pad2d(params["w2"], h1p, h2p),
        "b2": _pad2d(params["b2"].reshape(1, -1), 1, h2p),
        "w3": _pad2d(params["w3"], h2p, outp),
        "b3": _pad2d(params["b3"].reshape(1, -1), 1, outp),
        "tk": tk,                # static K tile (Python int)
        "out_features": out,
    }


def prepare_decoder_fc_input(x_nchw, padded_params, *, stream_dtype=STREAM_DTYPE):
    """Flatten exactly like torch's Linear on a flattened NCHW tensor, cast to the
    streamed dtype and zero-pad M/K ONCE, outside the per-call hot path."""
    b = x_nchw.shape[0]
    xf = x_nchw.reshape(b, -1).astype(stream_dtype)
    kp = padded_params["w1"].shape[0]
    mp = _round_up(max(b, _SUBLANE), _SUBLANE)
    if mp > _TILE_M_MAX:
        mp = _round_up(mp, _TILE_M_MAX)
    return _pad2d(xf, mp, kp), b


def decoder_fc_forward(x_padded_2d, padded_params):
    """Run the fused kernel on pre-padded activations; returns padded [Mp, OUTp] f32."""
    return _run_fused(x_padded_2d,
                      padded_params["w1"], padded_params["b1"],
                      padded_params["w2"], padded_params["b2"],
                      padded_params["w3"], padded_params["b3"],
                      tk=padded_params["tk"])


# ---------------------------------------------------------------------------
# Init + references
# ---------------------------------------------------------------------------
def init_decoder_fc_params(key, in_features, h1=H1, h2=H2, out=OUT):
    """PyTorch-style uniform(-1/sqrt(fan_in), 1/sqrt(fan_in)) init.

    Weights are stored as [in_features, out_features] (transpose of PyTorch's
    [out, in]) so the kernel computes y = x @ W + b directly on the MXU.
    """
    ks = jax.random.split(key, 6)

    def layer(kw, kb, fan_in, fan_out):
        bound = 1.0 / jnp.sqrt(jnp.float32(fan_in))
        w = jax.random.uniform(kw, (fan_in, fan_out), jnp.float32, -bound, bound)
        b = jax.random.uniform(kb, (fan_out,), jnp.float32, -bound, bound)
        return w, b

    w1, b1 = layer(ks[0], ks[1], in_features, h1)
    w2, b2 = layer(ks[2], ks[3], h1, h2)
    w3, b3 = layer(ks[4], ks[5], h2, out)
    return {"w1": w1, "b1": b1, "w2": w2, "b2": b2, "w3": w3, "b3": b3}


def _reference_forward(x_nchw, params, *, stream_dtype=jnp.float32):
    """Pure-JAX reference; stream_dtype mirrors the kernel's streamed-operand cast."""
    xf = x_nchw.reshape(x_nchw.shape[0], -1)
    h1_pre = jnp.dot(xf.astype(stream_dtype), params["w1"].astype(stream_dtype),
                     preferred_element_type=jnp.float32)
    h1 = jnp.maximum(h1_pre + params["b1"], 0.0)
    h2 = jnp.maximum(h1 @ params["w2"] + params["b2"], 0.0)
    return h2 @ params["w3"] + params["b3"]


# ---------------------------------------------------------------------------
# Demo / correctness check
# ---------------------------------------------------------------------------
if __name__ == "__main__":
    B, C, Hs, Ws = 2, 3, 16, 16        # small proxy for the module's 3x600x600 input
    in_features = C * Hs * Ws          # 768; target_tk=256 forces 3 K steps so the
                                       # K-reduction/accumulation path is exercised.

    key = jax.random.PRNGKey(0)
    k_x, k_p = jax.random.split(key)
    x = jax.random.normal(k_x, (B, C, Hs, Ws), jnp.float32)
    params = init_decoder_fc_params(k_p, in_features)

    padded_params = prepare_decoder_fc_params(params, target_tk=256)
    x2d, batch = prepare_decoder_fc_input(x, padded_params)

    out_padded = decoder_fc_forward(x2d, padded_params)
    out_padded = jax.block_until_ready(out_padded)
    out = out_padded[:batch, :padded_params["out_features"]]

    ref_bf16 = _reference_forward(x, params, stream_dtype=STREAM_DTYPE)
    ref_f32 = _reference_forward(x, params, stream_dtype=jnp.float32)

    assert out.shape == (B, OUT), out.shape
    assert jnp.allclose(out, ref_bf16, atol=2e-2, rtol=2e-2), \
        "mismatch vs bf16-streamed reference"
    assert jnp.allclose(out, ref_f32, atol=1e-1, rtol=1e-1), \
        "mismatch vs f32 reference (bf16 streaming sanity check)"

    print("KERNEL_OK")
</pallas_src>

<mosaic_0001>
module attributes {stable_mosaic.version = 11 : i64} {
  func.func @_decoder_fused_kernel(%arg0: i32, %arg1: i32, %arg2: memref<16x256xbf16, #tpu.memory_space<vmem>>, %arg3: memref<256x1280xbf16, #tpu.memory_space<vmem>>, %arg4: memref<1x1280xf32, #tpu.memory_space<vmem>>, %arg5: memref<1280x128xf32, #tpu.memory_space<vmem>>, %arg6: memref<1x128xf32, #tpu.memory_space<vmem>>, %arg7: memref<128x128xf32, #tpu.memory_space<vmem>>, %arg8: memref<1x128xf32, #tpu.memory_space<vmem>>, %arg9: memref<16x128xf32, #tpu.memory_space<vmem>>, %arg10: memref<16x1280xf32, #tpu.memory_space<vmem>>) attributes {dimension_semantics = [#tpu.dimension_semantics<parallel>, #tpu.dimension_semantics<arbitrary>], iteration_bounds = array<i64: 1, 3>, scalar_prefetch = 0 : i64, scratch_operands = 1 : i64, tpu.core_type = #tpu.core_type<tc>, window_params = [{transform_indices = @transform_0, window_bounds = array<i64: 16, 256>}, {transform_indices = @transform_1, window_bounds = array<i64: 256, 1280>}, {pipeline_mode = #tpu.pipeline_mode<synchronous>, transform_indices = @transform_2, window_bounds = array<i64: 1, 1280>}, {pipeline_mode = #tpu.pipeline_mode<synchronous>, transform_indices = @transform_3, window_bounds = array<i64: 1280, 128>}, {pipeline_mode = #tpu.pipeline_mode<synchronous>, transform_indices = @transform_4, window_bounds = array<i64: 1, 128>}, {pipeline_mode = #tpu.pipeline_mode<synchronous>, transform_indices = @transform_5, window_bounds = array<i64: 128, 128>}, {pipeline_mode = #tpu.pipeline_mode<synchronous>, transform_indices = @transform_6, window_bounds = array<i64: 1, 128>}, {transform_indices = @transform_7, window_bounds = array<i64: 16, 128>}]} {
    %c0_i32 = arith.constant 0 : i32
    %0 = arith.cmpi eq, %arg1, %c0_i32 : i32
    %1 = arith.extui %0 : i1 to i32
    %c0_i32_0 = arith.constant 0 : i32
    %2 = arith.cmpi ne, %1, %c0_i32_0 : i32
    scf.if %2 {
      %cst_9 = arith.constant 0.000000e+00 : f32
      %12 = vector.broadcast %cst_9 : f32 to vector<16x1280xf32>
      %c0_10 = arith.constant 0 : index
      %c0_11 = arith.constant 0 : index
      %13 = vector.load %arg10[%c0_10, %c0_11] : memref<16x1280xf32, #tpu.memory_space<vmem>>, vector<16x1280xf32>
      tpu.vector_store %arg10[%c0_10, %c0_11], %12 {strides = array<i32>} : memref<16x1280xf32, #tpu.memory_space<vmem>>, vector<16x1280xf32>,
    } else {
    }
    %c0 = arith.constant 0 : index
    %c0_1 = arith.constant 0 : index
    %3 = vector.load %arg10[%c0, %c0_1] : memref<16x1280xf32, #tpu.memory_space<vmem>>, vector<16x1280xf32>
    %c0_2 = arith.constant 0 : index
    %c0_3 = arith.constant 0 : index
    %4 = vector.load %arg2[%c0_2, %c0_3] : memref<16x256xbf16, #tpu.memory_space<vmem>>, vector<16x256xbf16>
    %c0_4 = arith.constant 0 : index
    %c0_5 = arith.constant 0 : index
    %5 = vector.load %arg3[%c0_4, %c0_5] : memref<256x1280xbf16, #tpu.memory_space<vmem>>, vector<256x1280xbf16>
    %cst = arith.constant dense<0.000000e+00> : vector<16x1280xf32>
    %6 = tpu.matmul %4, %5, %cst {dimension_numbers = #tpu.dot_dimension_numbers<[1], [0], [0], [1], [0, 0, 1, 1], [], []>} : vector<16x256xbf16>, vector<256x1280xbf16>, vector<16x1280xf32> -> vector<16x1280xf32>
    %7 = arith.addf %3, %6 : vector<16x1280xf32>
    %c0_6 = arith.constant 0 : index
    %c0_7 = arith.constant 0 : index
    %8 = vector.load %arg10[%c0_6, %c0_7] : memref<16x1280xf32, #tpu.memory_space<vmem>>, vector<16x1280xf32>
    tpu.vector_store %arg10[%c0_6, %c0_7], %7 {strides = array<i32>} : memref<16x1280xf32, #tpu.memory_space<vmem>>, vector<16x1280xf32>,
    %c2_i32 = arith.constant 2 : i32
    %9 = arith.cmpi eq, %arg1, %c2_i32 : i32
    %10 = arith.extui %9 : i1 to i32
    %c0_i32_8 = arith.constant 0 : i32
    %11 = arith.cmpi ne, %10, %c0_i32_8 : i32
    scf.if %11 {
      %c0_9 = arith.constant 0 : index
      %c0_10 = arith.constant 0 : index
      %12 = vector.load %arg10[%c0_9, %c0_10] : memref<16x1280xf32, #tpu.memory_space<vmem>>, vector<16x1280xf32>
      %c0_11 = arith.constant 0 : index
      %c0_12 = arith.constant 0 : index
      %13 = vector.load %arg4[%c0_11, %c0_12] : memref<1x1280xf32, #tpu.memory_space<vmem>>, vector<1x1280xf32>
      %14 = vector.broadcast %13 : vector<1x1280xf32> to vector<16x1280xf32>
      %15 = arith.addf %12, %14 : vector<16x1280xf32>
      %cst_13 = arith.constant 0.000000e+00 : f32
      %16 = vector.broadcast %cst_13 : f32 to vector<16x1280xf32>
      %17 = arith.maximumf %15, %16 : vector<16x1280xf32>
      %c0_14 = arith.constant 0 : index
      %c0_15 = arith.constant 0 : index
      %18 = vector.load %arg5[%c0_14, %c0_15] : memref<1280x128xf32, #tpu.memory_space<vmem>>, vector<1280x128xf32>
      %cst_16 = arith.constant dense<0.000000e+00> : vector<16x128xf32>
      %19 = tpu.matmul %17, %18, %cst_16 {dimension_numbers = #tpu.dot_dimension_numbers<[1], [0], [0], [1], [0, 0, 1, 1], [], []>} : vector<16x1280xf32>, vector<1280x128xf32>, vector<16x128xf32> -> vector<16x128xf32>
      %c0_17 = arith.constant 0 : index
      %c0_18 = arith.constant 0 : index
      %20 = vector.load %arg6[%c0_17, %c0_18] : memref<1x128xf32, #tpu.memory_space<vmem>>, vector<1x128xf32>
      %21 = vector.broadcast %20 : vector<1x128xf32> to vector<16x128xf32>
      %22 = arith.addf %19, %21 : vector<16x128xf32>
      %cst_19 = arith.constant 0.000000e+00 : f32
      %23 = vector.broadcast %cst_19 : f32 to vector<16x128xf32>
      %24 = arith.maximumf %22, %23 : vector<16x128xf32>
      %c0_20 = arith.constant 0 : index
      %c0_21 = arith.constant 0 : index
      %25 = vector.load %arg7[%c0_20, %c0_21] : memref<128x128xf32, #tpu.memory_space<vmem>>, vector<128x128xf32>
      %cst_22 = arith.constant dense<0.000000e+00> : vector<16x128xf32>
      %26 = tpu.matmul %24, %25, %cst_22 {dimension_numbers = #tpu.dot_dimension_numbers<[1], [0], [0], [1], [0, 0, 1, 1], [], []>} : vector<16x128xf32>, vector<128x128xf32>, vector<16x128xf32> -> vector<16x128xf32>
      %c0_23 = arith.constant 0 : index
      %c0_24 = arith.constant 0 : index
      %27 = vector.load %arg8[%c0_23, %c0_24] : memref<1x128xf32, #tpu.memory_space<vmem>>, vector<1x128xf32>
      %28 = vector.broadcast %27 : vector<1x128xf32> to vector<16x128xf32>
      %29 = arith.addf %26, %28 : vector<16x128xf32>
      %c0_25 = arith.constant 0 : index
      %c0_26 = arith.constant 0 : index
      %30 = vector.load %arg9[%c0_25, %c0_26] : memref<16x128xf32, #tpu.memory_space<vmem>>, vector<16x128xf32>
      tpu.vector_store %arg9[%c0_25, %c0_26], %29 {strides = array<i32>} : memref<16x128xf32, #tpu.memory_space<vmem>>, vector<16x128xf32>,
    } else {
    }
    return
  }
  func.func @transform_0(%arg0: i32, %arg1: i32) -> (i32, i32) {
    %c0_i32 = arith.constant 0 : i32
    return %arg0, %arg1 : i32, i32
  }
  func.func @transform_1(%arg0: i32, %arg1: i32) -> (i32, i32) {
    %c0_i32 = arith.constant 0 : i32
    %c0_i32_0 = arith.constant 0 : i32
    return %arg1, %c0_i32 : i32, i32
  }
  func.func @transform_2(%arg0: i32, %arg1: i32) -> (i32, i32) {
    %c0_i32 = arith.constant 0 : i32
    %c0_i32_0 = arith.constant 0 : i32
    %c0_i32_1 = arith.constant 0 : i32
    return %c0_i32, %c0_i32_0 : i32, i32
  }
  func.func @transform_3(%arg0: i32, %arg1: i32) -> (i32, i32) {
    %c0_i32 = arith.constant 0 : i32
    %c0_i32_0 = arith.constant 0 : i32
    %c0_i32_1 = arith.constant 0 : i32
    return %c0_i32, %c0_i32_0 : i32, i32
  }
  func.func @transform_4(%arg0: i32, %arg1: i32) -> (i32, i32) {
    %c0_i32 = arith.constant 0 : i32
    %c0_i32_0 = arith.constant 0 : i32
    %c0_i32_1 = arith.constant 0 : i32
    return %c0_i32, %c0_i32_0 : i32, i32
  }
  func.func @transform_5(%arg0: i32, %arg1: i32) -> (i32, i32) {
    %c0_i32 = arith.constant 0 : i32
    %c0_i32_0 = arith.constant 0 : i32
    %c0_i32_1 = arith.constant 0 : i32
    return %c0_i32, %c0_i32_0 : i32, i32
  }
  func.func @transform_6(%arg0: i32, %arg1: i32) -> (i32, i32) {
    %c0_i32 = arith.constant 0 : i32
    %c0_i32_0 = arith.constant 0 : i32
    %c0_i32_1 = arith.constant 0 : i32
    return %c0_i32, %c0_i32_0 : i32, i32
  }
  func.func @transform_7(%arg0: i32, %arg1: i32) -> (i32, i32) {
    %c0_i32 = arith.constant 0 : i32
    %c0_i32_0 = arith.constant 0 : i32
    return %arg0, %c0_i32 : i32, i32
  }
}

</mosaic_0001>

<llo_original>
// kernel: _run_fused.1
$region0: #{_run_fused.1}
  #allocation0 [shape = 'u32[]', space=smem, size = 0x4, offset = 0x4, fixed_abs, tag = 'smem constant byte address 0x4 - core index']
  #allocation1 [shape = 'u32[144,128]{1,0:T(1,128)}', space=vmem, size = 0x12000, scoped, tag = 'internal scratch']
  #allocation2 [shape = 'f32[16,1280]{1,0:T(8,128)}', space=vmem, size = 0x14000, scoped, tag = 'scratch operand']
  %s0 = inlined_call_operand.hbm [shape: bf16[16,768], index: 0, kind: input, shape index: {}]
  %s1 = inlined_call_operand.hbm [shape: bf16[768,1280], index: 1, kind: input, shape index: {}]
  %s2 = inlined_call_operand.hbm [shape: f32[1,1280], index: 2, kind: input, shape index: {}]
  %s3 = inlined_call_operand.hbm [shape: f32[1280,128], index: 3, kind: input, shape index: {}]
  %s4 = inlined_call_operand.hbm [shape: f32[1,128], index: 4, kind: input, shape index: {}]
  %s5 = inlined_call_operand.hbm [shape: f32[128,128], index: 5, kind: input, shape index: {}]
  %s6 = inlined_call_operand.hbm [shape: f32[1,128], index: 6, kind: input, shape index: {}]
  %s7 = inlined_call_operand.hbm [shape: f32[16,128], index: 7, kind: output, shape index: {}]
  %s8 = sld [smem:[#allocation0]]
  $region97: #{_run_fused.1} parent=0
    _
  %s10 = ssub.s32 1, %s8
  %s11 = scalar_select 0, %s10, %s8
  $region1: #{_run_fused.1} parent=0
    #allocation3 [shape = 'u8[16384]{0}', space=vmem, size = 0x4000, scoped, tag = 'input window, operand 0']
    #allocation4 [shape = 's32[2]{0}', space=sflag, size = 0x8, scoped, tag = 'scoped memory for _run_fused.1']
    #allocation5 [shape = 's32[2]{0}', space=sflag, size = 0x8, scoped, tag = 'scoped memory for _run_fused.1']
    #allocation6 [shape = 'u8[1310720]{0}', space=vmem, size = 0x140000, scoped, tag = 'input window, operand 1']
    #allocation7 [shape = 's32[2]{0}', space=sflag, size = 0x8, scoped, tag = 'scoped memory for _run_fused.1']
    #allocation8 [shape = 'u8[5120]{0}', space=vmem, size = 0x1400, scoped, tag = 'input window, operand 2, single buffered']
    #allocation9 [shape = 'u8[655360]{0}', space=vmem, size = 0xa0000, scoped, tag = 'input window, operand 3, single buffered']
    #allocation10 [shape = 's32[1]{0}', space=sflag, size = 0x4, scoped, tag = 'scoped memory for _run_fused.1']
    #allocation11 [shape = 'u8[512]{0}', space=vmem, size = 0x400, scoped, tag = 'input window, operand 4, single buffered']
    #allocation12 [shape = 'u8[65536]{0}', space=vmem, size = 0x10000, scoped, tag = 'input window, operand 5, single buffered']
    #allocation13 [shape = 's32[1]{0}', space=sflag, size = 0x4, scoped, tag = 'scoped memory for _run_fused.1']
    #allocation14 [shape = 'u8[512]{0}', space=vmem, size = 0x400, scoped, tag = 'input window, operand 6, single buffered']
    #allocation15 [shape = 'u8[8192]{0}', space=vmem, size = 0x2000, scoped, tag = 'output window, operand 0, single buffered']
    %12 = vsyncpa [#allocation4], 0
    %s13 = scalar_lea.sflag [#allocation4], 1
    %14 = vsyncpa %s13, 0
    %15 = vsyncpa [#allocation7], 0
    %s16 = scalar_lea.sflag [#allocation7], 1
    %17 = vsyncpa %s16, 0
    %18 = vsyncpa [#allocation10], 0
    %19 = vsyncpa [#allocation13], 0
    %20 = vsyncpa [#allocation5], 0
    loop: start=0, step=1, limit=5
    $region2: #{_run_fused.1} parent=1 // loop_pre_header
      _
    $region3: #{_run_fused.1} parent=1 // loop_header
      %s22 = sphi 0, %s26
      %p23 = scmp.ge.s32.totalorder %s22, 5
      %s29 = sphi 0, %s41
      %s30 = sphi 0, %s37
      %s31 = sphi 0, %s29
      %s32 = sphi 0, %s30
      %s33 = sphi 0, %s31
      %s34 = sphi 0, %s32
      %s46 = sphi 0, %s48
      %s49 = sphi 0, %s46
      %s50 = sphi 0, %s49
      %s66 = sphi 0, %s50
      %s72 = sphi 0, %s74
      %s75 = sphi 0, %s72
      %s76 = sphi 0, %s75
      %s92 = sphi 0, %s76
      %s96 = sphi 0, %s96
      %s98 = sphi 0, %s96
      %s99 = sphi 0, %s98
      %s113 = sphi 0, %s99
      %s117 = sphi 0, %s117
      %s119 = sphi 0, %s117
      %s120 = sphi 0, %s119
      %s134 = sphi 0, %s120
      %s138 = sphi 0, %s138
      %s140 = sphi 0, %s138
      %s141 = sphi 0, %s140
      %s155 = sphi 0, %s141
      %s159 = sphi 0, %s159
      %s161 = sphi 0, %s159
      %s162 = sphi 0, %s161
      %s176 = sphi 0, %s162
      %s180 = sphi 0, %s180
      %s182 = sphi 0, %s180
      %s183 = sphi 0, %s182
      %s197 = sphi 0, %s183
      %s203 = sphi 0, %s205
      %s206 = sphi 0, %s203
      %s207 = sphi 0, %s206
      %s223 = sphi 0, %s207
    $region4: #{_run_fused.1} parent=1 // loop_header_branch
      %25 = sbr.rel (%p23) target = $region8
    $region5: #{_run_fused.1} parent=1 // loop_body
      %s27 = ssub.s32 %s22, 1
      %s28 = ssub.s32 %s22, 2
      %s35 = sadd.s32 1, %s30
      %p36 = scmp.ge.s32.totalorder %s35, 3
      %s37 = scalar_select %p36, 0, %s35
      %s38 = sadd.s32 1, %s29
      %s39 = scalar_select %p36, %s38, %s29
      %p40 = scmp.ge.s32.totalorder %s39, 1
      %s41 = scalar_select %p40, 0, %s39
      %s42 = ssub.s32 %s29, %s41
      %s43 = ssub.s32 %s30, %s37
      %s44 = sor.u32 %s42, %s43
      %p45 = scmp.eq.s32.totalorder %s44, 0
      %s47 = sadd.s32 %s46, 1
      %s48 = scalar_select %p45, %s46, %s47
      %p51 = pneg %p45
      %p52 = scmp.eq.s32.totalorder %s22, 2
      %p53 = por %p51, %p52
      %p54 = scmp.ne.s32.totalorder %s46, %s49
      %p55 = scmp.eq.s32.totalorder %s22, 0
      %p56 = por %p54, %p55
      %p57 = scmp.ne.s32.totalorder %s46, %s49
      %p58 = scmp.eq.s32.totalorder %s27, 2
      %p59 = por %p57, %p58
      %p60 = scmp.ne.s32.totalorder %s49, %s50
      %p61 = scmp.eq.s32.totalorder %s27, 0
      %p62 = por %p60, %p61
      %p63 = scmp.ne.s32.totalorder %s49, %s50
      %p64 = scmp.eq.s32.totalorder %s28, 2
      %p65 = por %p63, %p64
      %p67 = scmp.ne.s32.totalorder %s50, %s66
      %p68 = scmp.eq.s32.totalorder %s28, 0
      %p69 = por %p67, %p68
      %s70 = ssub.s32 %s30, %s37
      %p71 = scmp.eq.s32.totalorder %s70, 0
      %s73 = sadd.s32 %s72, 1
      %s74 = scalar_select %p71, %s72, %s73
      %p77 = pneg %p71
      %p78 = scmp.eq.s32.totalorder %s22, 2
      %p79 = por %p77, %p78
      %p80 = scmp.ne.s32.totalorder %s72, %s75
      %p81 = scmp.eq.s32.totalorder %s22, 0
      %p82 = por %p80, %p81
      %p83 = scmp.ne.s32.totalorder %s72, %s75
      %p84 = scmp.eq.s32.totalorder %s27, 2
      %p85 = por %p83, %p84
      %p86 = scmp.ne.s32.totalorder %s75, %s76
      %p87 = scmp.eq.s32.totalorder %s27, 0
      %p88 = por %p86, %p87
      %p89 = scmp.ne.s32.totalorder %s75, %s76
      %p90 = scmp.eq.s32.totalorder %s28, 2
      %p91 = por %p89, %p90
      %p93 = scmp.ne.s32.totalorder %s76, %s92
      %p94 = scmp.eq.s32.totalorder %s28, 0
      %p95 = por %p93, %p94
      %s97 = sadd.s32 %s96, 1
      %p100 = scmp.eq.s32.totalorder %s22, 2
      %p101 = scmp.ne.s32.totalorder %s96, %s98
      %p102 = scmp.eq.s32.totalorder %s22, 0
      %p103 = por %p101, %p102
      %p104 = scmp.ne.s32.totalorder %s96, %s98
      %p105 = scmp.eq.s32.totalorder %s27, 2
      %p106 = por %p104, %p105
      %p107 = scmp.ne.s32.totalorder %s98, %s99
      %p108 = scmp.eq.s32.totalorder %s27, 0
      %p109 = por %p107, %p108
      %p110 = scmp.ne.s32.totalorder %s98, %s99
      %p111 = scmp.eq.s32.totalorder %s28, 2
      %p112 = por %p110, %p111
      %p114 = scmp.ne.s32.totalorder %s99, %s113
      %p115 = scmp.eq.s32.totalorder %s28, 0
      %p116 = por %p114, %p115
      %s118 = sadd.s32 %s117, 1
      %p121 = scmp.eq.s32.totalorder %s22, 2
      %p122 = scmp.ne.s32.totalorder %s117, %s119
      %p123 = scmp.eq.s32.totalorder %s22, 0
      %p124 = por %p122, %p123
      %p125 = scmp.ne.s32.totalorder %s117, %s119
      %p126 = scmp.eq.s32.totalorder %s27, 2
      %p127 = por %p125, %p126
      %p128 = scmp.ne.s32.totalorder %s119, %s120
      %p129 = scmp.eq.s32.totalorder %s27, 0
      %p130 = por %p128, %p129
      %p131 = scmp.ne.s32.totalorder %s119, %s120
      %p132 = scmp.eq.s32.totalorder %s28, 2
      %p133 = por %p131, %p132
      %p135 = scmp.ne.s32.totalorder %s120, %s134
      %p136 = scmp.eq.s32.totalorder %s28, 0
      %p137 = por %p135, %p136
      %s139 = sadd.s32 %s138, 1
      %p142 = scmp.eq.s32.totalorder %s22, 2
      %p143 = scmp.ne.s32.totalorder %s138, %s140
      %p144 = scmp.eq.s32.totalorder %s22, 0
      %p145 = por %p143, %p144
      %p146 = scmp.ne.s32.totalorder %s138, %s140
      %p147 = scmp.eq.s32.totalorder %s27, 2
      %p148 = por %p146, %p147
      %p149 = scmp.ne.s32.totalorder %s140, %s141
      %p150 = scmp.eq.s32.totalorder %s27, 0
      %p151 = por %p149, %p150
      %p152 = scmp.ne.s32.totalorder %s140, %s141
      %p153 = scmp.eq.s32.totalorder %s28, 2
      %p154 = por %p152, %p153
      %p156 = scmp.ne.s32.totalorder %s141, %s155
      %p157 = scmp.eq.s32.totalorder %s28, 0
      %p158 = por %p156, %p157
      %s160 = sadd.s32 %s159, 1
      %p163 = scmp.eq.s32.totalorder %s22, 2
      %p164 = scmp.ne.s32.totalorder %s159, %s161
      %p165 = scmp.eq.s32.totalorder %s22, 0
      %p166 = por %p164, %p165
      %p167 = scmp.ne.s32.totalorder %s159, %s161
      %p168 = scmp.eq.s32.totalorder %s27, 2
      %p169 = por %p167, %p168
      %p170 = scmp.ne.s32.totalorder %s161, %s162
      %p171 = scmp.eq.s32.totalorder %s27, 0
      %p172 = por %p170, %p171
      %p173 = scmp.ne.s32.totalorder %s161, %s162
      %p174 = scmp.eq.s32.totalorder %s28, 2
      %p175 = por %p173, %p174
      %p177 = scmp.ne.s32.totalorder %s162, %s176
      %p178 = scmp.eq.s32.totalorder %s28, 0
      %p179 = por %p177, %p178
      %s181 = sadd.s32 %s180, 1
      %p184 = scmp.eq.s32.totalorder %s22, 2
      %p185 = scmp.ne.s32.totalorder %s180, %s182
      %p186 = scmp.eq.s32.totalorder %s22, 0
      %p187 = por %p185, %p186
      %p188 = scmp.ne.s32.totalorder %s180, %s182
      %p189 = scmp.eq.s32.totalorder %s27, 2
      %p190 = por %p188, %p189
      %p191 = scmp.ne.s32.totalorder %s182, %s183
      %p192 = scmp.eq.s32.totalorder %s27, 0
      %p193 = por %p191, %p192
      %p194 = scmp.ne.s32.totalorder %s182, %s183
      %p195 = scmp.eq.s32.totalorder %s28, 2
      %p196 = por %p194, %p195
      %p198 = scmp.ne.s32.totalorder %s183, %s197
      %p199 = scmp.eq.s32.totalorder %s28, 0
      %p200 = por %p198, %p199
      %s201 = ssub.s32 %s29, %s41
      %p202 = scmp.eq.s32.totalorder %s201, 0
      %s204 = sadd.s32 %s203, 1
      %s205 = scalar_select %p202, %s203, %s204
      %p208 = pneg %p202
      %p209 = scmp.eq.s32.totalorder %s22, 2
      %p210 = por %p208, %p209
      %p211 = scmp.ne.s32.totalorder %s203, %s206
      %p212 = scmp.eq.s32.totalorder %s22, 0
      %p213 = por %p211, %p212
      %p214 = scmp.ne.s32.totalorder %s203, %s206
      %p215 = scmp.eq.s32.totalorder %s27, 2
      %p216 = por %p214, %p215
      %p217 = scmp.ne.s32.totalorder %s206, %s207
      %p218 = scmp.eq.s32.totalorder %s27, 0
      %p219 = por %p217, %p218
      %p220 = scmp.ne.s32.totalorder %s206, %s207
      %p221 = scmp.eq.s32.totalorder %s28, 2
      %p222 = por %p220, %p221
      %p224 = scmp.ne.s32.totalorder %s207, %s223
      %p225 = scmp.eq.s32.totalorder %s28, 0
      %p226 = por %p224, %p225
      %p227 = scmp.le.s32.totalorder 1, %s22
      %p228 = scmp.lt.s32.totalorder %s22, 4
      %p229 = pnand %p227, %p228
      %p230 = pneg %p229
      // Predicated region
      $region9: #{_run_fused.1} parent=5 // pred_check
        _
      $region10: #{_run_fused.1} parent=5 // pred_check_branch
        %232 = sbr.rel (%p229) target = $region12
      $region11: #{_run_fused.1} parent=5 // pred_region
        %s233 = ssub.s32 %s22, 1
        // Predicated region
        $region13: #{_run_fused.1} parent=11 // pred_check
          %p234 = pneg %p109
        $region14: #{_run_fused.1} parent=11 // pred_check_branch
          %236 = sbr.rel (%p234) target = $region16
        $region15: #{_run_fused.1} parent=11 // pred_region
          %s238 = ssub.s32 160, 160
          %239 = vsyncadd [#allocation7], %s238
          %s241 = sshll.u32 [#allocation8], 4
          %s242 = int_to_ptr.vmem [resolvable:$true] %s241
          %244 = dma.hbm_to_vmem [thread:$0]  %s2, 160, %s242, [#allocation7]
        $region16: #{_run_fused.1} parent=11 // pred_fallthru
          _
        // Predicated region
        $region17: #{_run_fused.1} parent=11 // pred_check
          %p245 = pneg %p130
        $region18: #{_run_fused.1} parent=11 // pred_check_branch
          %247 = sbr.rel (%p245) target = $region20
        $region19: #{_run_fused.1} parent=11 // pred_region
          %s249 = ssub.s32 20480, 20480
          %250 = vsyncadd [#allocation10], %s249
          %s251 = sshll.u32 [#allocation9], 4
          %s252 = int_to_ptr.vmem [resolvable:$true] %s251
          %257 = dma.hbm_to_vmem [thread:$0]  %s3, 20480, %s252, [#allocation10], 128, 128, 8
        $region20: #{_run_fused.1} parent=11 // pred_fallthru
          _
        // Predicated region
        $region21: #{_run_fused.1} parent=11 // pred_check
          %p258 = pneg %p151
        $region22: #{_run_fused.1} parent=11 // pred_check_branch
          %260 = sbr.rel (%p258) target = $region24
        $region23: #{_run_fused.1} parent=11 // pred_region
          %s262 = ssub.s32 16, 16
          %263 = vsyncadd [#allocation10], %s262
          %s265 = sshll.u32 [#allocation11], 4
          %s266 = int_to_ptr.vmem [resolvable:$true] %s265
          %268 = dma.hbm_to_vmem [thread:$0]  %s4, 16, %s266, [#allocation10]
        $region24: #{_run_fused.1} parent=11 // pred_fallthru
          _
        // Predicated region
        $region25: #{_run_fused.1} parent=11 // pred_check
          %p269 = pneg %p172
        $region26: #{_run_fused.1} parent=11 // pred_check_branch
          %271 = sbr.rel (%p269) target = $region28
        $region27: #{_run_fused.1} parent=11 // pred_region
          %s273 = ssub.s32 2048, 2048
          %274 = vsyncadd [#allocation13], %s273
          %s275 = sshll.u32 [#allocation12], 4
          %s276 = int_to_ptr.vmem [resolvable:$true] %s275
          %281 = dma.hbm_to_vmem [thread:$0]  %s5, 2048, %s276, [#allocation13], 128, 128, 8
        $region28: #{_run_fused.1} parent=11 // pred_fallthru
          _
        // Predicated region
        $region29: #{_run_fused.1} parent=11 // pred_check
          %p282 = pneg %p193
        $region30: #{_run_fused.1} parent=11 // pred_check_branch
          %284 = sbr.rel (%p282) target = $region32
        $region31: #{_run_fused.1} parent=11 // pred_region
          %s286 = ssub.s32 16, 16
          %287 = vsyncadd [#allocation13], %s286
          %s289 = sshll.u32 [#allocation14], 4
          %s290 = int_to_ptr.vmem [resolvable:$true] %s289
          %292 = dma.hbm_to_vmem [thread:$0]  %s6, 16, %s290, [#allocation13]
        $region32: #{_run_fused.1} parent=11 // pred_fallthru
          _
      $region12: #{_run_fused.1} parent=5 // pred_fallthru
        _
      %p293 = scmp.lt.s32.totalorder %s22, 3
      // Predicated region
      $region33: #{_run_fused.1} parent=5 // pred_check
        %p294 = pneg %p293
      $region34: #{_run_fused.1} parent=5 // pred_check_branch
        %296 = sbr.rel (%p294) target = $region36
      $region35: #{_run_fused.1} parent=5 // pred_region
        // Predicated region
        $region37: #{_run_fused.1} parent=35 // pred_check
          %p297 = pneg %p56
        $region38: #{_run_fused.1} parent=35 // pred_check_branch
          %299 = sbr.rel (%p297) target = $region40
        $region39: #{_run_fused.1} parent=35 // pred_region
          %s300 = sand.u32 %s46, 1
          %s301 = scalar_lea.sflag [#allocation4], %s300
          %s302 = sand.u32 %s46, 1
          %s303 = smul.addr %s302, 16
          %s304 = scalar_lea.vmem [#allocation3], %s303
          %s305 = smul.u32 2, %s29
          %s306 = smul.u32 2, %s30
          %s308 = ssub.s32 256, 256
          %309 = vsyncadd %s301, %s308
          %s310 = smul.addr %s305, 6
          %s311 = sadd.s32 %s306, %s310
          %s312 = smul.addr %s311, 64
          %s313 = scalar_lea.hbm %s0, %s312
          %s314 = sshll.u32 %s304, 4
          %s315 = int_to_ptr.vmem [resolvable:$true] %s314
          %320 = dma.hbm_to_vmem [thread:$0]  %s313, 256, %s315, %s301, 384, 128, 8
        $region40: #{_run_fused.1} parent=35 // pred_fallthru
          _
        // Predicated region
        $region41: #{_run_fused.1} parent=35 // pred_check
          %p321 = pneg %p82
        $region42: #{_run_fused.1} parent=35 // pred_check_branch
          %323 = sbr.rel (%p321) target = $region44
        $region43: #{_run_fused.1} parent=35 // pred_region
          %s324 = sand.u32 %s22, 1
          %s325 = scalar_lea.sflag [#allocation7], %s324
          %s326 = sand.u32 %s72, 1
          %s327 = smul.addr %s326, 1280
          %s328 = scalar_lea.vmem [#allocation6], %s327
          %s329 = smul.u32 32, %s30
          %s331 = ssub.s32 20480, 20480
          %332 = vsyncadd %s325, %s331
          %s333 = smul.addr %s329, 10
          %s334 = smul.addr %s333, 64
          %s335 = scalar_lea.hbm %s1, %s334
          %s336 = sshll.u32 %s328, 4
          %s337 = int_to_ptr.vmem [resolvable:$true] %s336
          %342 = dma.hbm_to_vmem [thread:$0]  %s335, 20480, %s337, %s325, 640, 640, 40
        $region44: #{_run_fused.1} parent=35 // pred_fallthru
          _
      $region36: #{_run_fused.1} parent=5 // pred_fallthru
        _
      %p343 = scmp.le.s32.totalorder 1, %s22
      %p344 = scmp.lt.s32.totalorder %s22, 4
      %p345 = pnand %p343, %p344
      %p346 = pneg %p345
      // Predicated region
      $region45: #{_run_fused.1} parent=5 // pred_check
        _
      $region46: #{_run_fused.1} parent=5 // pred_check_branch
        %348 = sbr.rel (%p345) target = $region48
      $region47: #{_run_fused.1} parent=5 // pred_region
        %s349 = ssub.s32 %s22, 1
        %s350 = sand.u32 %s49, 1
        %s351 = scalar_lea.sflag [#allocation4], %s350
        %s352 = sand.u32 %s49, 1
        %s353 = smul.addr %s352, 16
        %s354 = scalar_lea.vmem [#allocation3], %s353
        // Predicated region
        $region49: #{_run_fused.1} parent=47 // pred_check
          %p355 = pneg %p62
        $region50: #{_run_fused.1} parent=47 // pred_check_branch
          %357 = sbr.rel (%p355) target = $region52
        $region51: #{_run_fused.1} parent=47 // pred_region
          %358 = dma.done %s351, 256
        $region52: #{_run_fused.1} parent=47 // pred_fallthru
          _
        %s359 = sand.u32 %s27, 1
        %s360 = scalar_lea.sflag [#allocation7], %s359
        %s361 = sand.u32 %s75, 1
        %s362 = smul.addr %s361, 1280
        %s363 = scalar_lea.vmem [#allocation6], %s362
        // Predicated region
        $region53: #{_run_fused.1} parent=47 // pred_check
          %p364 = pneg %p88
        $region54: #{_run_fused.1} parent=47 // pred_check_branch
          %366 = sbr.rel (%p364) target = $region56
        $region55: #{_run_fused.1} parent=47 // pred_region
          %367 = dma.done %s360, 20480
        $region56: #{_run_fused.1} parent=47 // pred_fallthru
          _
        // Predicated region
        $region57: #{_run_fused.1} parent=47 // pred_check
          %p368 = pneg %p109
        $region58: #{_run_fused.1} parent=47 // pred_check_branch
          %370 = sbr.rel (%p368) target = $region60
        $region59: #{_run_fused.1} parent=47 // pred_region
          %371 = dma.done [#allocation7], 160
        $region60: #{_run_fused.1} parent=47 // pred_fallthru
          _
        // Predicated region
        $region61: #{_run_fused.1} parent=47 // pred_check
          %p372 = pneg %p130
        $region62: #{_run_fused.1} parent=47 // pred_check_branch
          %374 = sbr.rel (%p372) target = $region64
        $region63: #{_run_fused.1} parent=47 // pred_region
          %375 = dma.done [#allocation10], 20480
        $region64: #{_run_fused.1} parent=47 // pred_fallthru
          _
        // Predicated region
        $region65: #{_run_fused.1} parent=47 // pred_check
          %p376 = pneg %p151
        $region66: #{_run_fused.1} parent=47 // pred_check_branch
          %378 = sbr.rel (%p376) target = $region68
        $region67: #{_run_fused.1} parent=47 // pred_region
          %379 = dma.done [#allocation10], 16
        $region68: #{_run_fused.1} parent=47 // pred_fallthru
          _
        // Predicated region
        $region69: #{_run_fused.1} parent=47 // pred_check
          %p380 = pneg %p172
        $region70: #{_run_fused.1} parent=47 // pred_check_branch
          %382 = sbr.rel (%p380) target = $region72
        $region71: #{_run_fused.1} parent=47 // pred_region
          %383 = dma.done [#allocation13], 2048
        $region72: #{_run_fused.1} parent=47 // pred_fallthru
          _
        // Predicated region
        $region73: #{_run_fused.1} parent=47 // pred_check
          %p384 = pneg %p193
        $region74: #{_run_fused.1} parent=47 // pred_check_branch
          %386 = sbr.rel (%p384) target = $region76
        $region75: #{_run_fused.1} parent=47 // pred_region
          %387 = dma.done [#allocation13], 16
        $region76: #{_run_fused.1} parent=47 // pred_fallthru
          _
        %s388 = sand.u32 %s49, 1
        %s389 = scalar_lea.sflag [#allocation4], %s388
        %s390 = sand.u32 %s49, 1
        %s391 = smul.addr %s390, 16
        %s392 = scalar_lea.vmem [#allocation3], %s391
        %p393 = pneg %p62
        %p394 = pneg %p59
        %s395 = sand.u32 %s27, 1
        %s396 = scalar_lea.sflag [#allocation7], %s395
        %s397 = sand.u32 %s75, 1
        %s398 = smul.addr %s397, 1280
        %s399 = scalar_lea.vmem [#allocation6], %s398
        %p400 = pneg %p88
        %p401 = pneg %p85
        %p402 = pneg %p109
        %p403 = pneg %p106
        %p404 = pneg %p130
        %p405 = pneg %p127
        %p406 = pneg %p151
        %p407 = pneg %p148
        %p408 = pneg %p172
        %p409 = pneg %p169
        %p410 = pneg %p193
        %p411 = pneg %p190
        %p412 = pneg %p219
        %p413 = pneg %p216
        %s414 = smul.u32 2, %s31
        %s415 = smul.u32 2, %s32
        %s416 = smul.u32 32, %s32
        %s417 = smul.u32 2, %s31
        %p418 = scmp.eq.s32.totalorder %s32, 0
        // Predicated region
        $region77: #{_run_fused.1} parent=47 // pred_check
          %p419 = pneg %p418
        $region78: #{_run_fused.1} parent=47 // pred_check_branch
          %421 = sbr.rel (%p419) target = $region80
        $region79: #{_run_fused.1} parent=47 // pred_region
          %422 = vst [vmem:[#allocation2] sm:$0xff] 0.0
          %423 = vst [vmem:[#allocation2 + $0x8] sm:$0xff] 0.0
          %424 = vst [vmem:[#allocation2 + $0x10] sm:$0xff] 0.0
          %425 = vst [vmem:[#allocation2 + $0x18] sm:$0xff] 0.0
          %426 = vst [vmem:[#allocation2 + $0x20] sm:$0xff] 0.0
          %427 = vst [vmem:[#allocation2 + $0x28] sm:$0xff] 0.0
          %428 = vst [vmem:[#allocation2 + $0x30] sm:$0xff] 0.0
          %429 = vst [vmem:[#allocation2 + $0x38] sm:$0xff] 0.0
          %430 = vst [vmem:[#allocation2 + $0x40] sm:$0xff] 0.0
          %431 = vst [vmem:[#allocation2 + $0x48] sm:$0xff] 0.0
          %432 = vst [vmem:[#allocation2 + $0x50] sm:$0xff] 0.0
          %433 = vst [vmem:[#allocation2 + $0x58] sm:$0xff] 0.0
          %434 = vst [vmem:[#allocation2 + $0x60] sm:$0xff] 0.0
          %435 = vst [vmem:[#allocation2 + $0x68] sm:$0xff] 0.0
          %436 = vst [vmem:[#allocation2 + $0x70] sm:$0xff] 0.0
          %437 = vst [vmem:[#allocation2 + $0x78] sm:$0xff] 0.0
          %438 = vst [vmem:[#allocation2 + $0x80] sm:$0xff] 0.0
          %439 = vst [vmem:[#allocation2 + $0x88] sm:$0xff] 0.0
          %440 = vst [vmem:[#allocation2 + $0x90] sm:$0xff] 0.0
          %441 = vst [vmem:[#allocation2 + $0x98] sm:$0xff] 0.0
        $region80: #{_run_fused.1} parent=47 // pred_fallthru
          _
        %v442 = vld [vmem:[#allocation2] sm:$0xff]
        %v443 = vld [vmem:[#allocation2 + $0x8] sm:$0xff]
        %v444 = vld [vmem:[#allocation2 + $0x10] sm:$0xff]
        %v445 = vld [vmem:[#allocation2 + $0x18] sm:$0xff]
        %v446 = vld [vmem:[#allocation2 + $0x20] sm:$0xff]
        %v447 = vld [vmem:[#allocation2 + $0x28] sm:$0xff]
        %v448 = vld [vmem:[#allocation2 + $0x30] sm:$0xff]
        %v449 = vld [vmem:[#allocation2 + $0x38] sm:$0xff]
        %v450 = vld [vmem:[#allocation2 + $0x40] sm:$0xff]
        %v451 = vld [vmem:[#allocation2 + $0x48] sm:$0xff]
        %v452 = vld [vmem:[#allocation2 + $0x50] sm:$0xff]
        %v453 = vld [vmem:[#allocation2 + $0x58] sm:$0xff]
        %v454 = vld [vmem:[#allocation2 + $0x60] sm:$0xff]
        %v455 = vld [vmem:[#allocation2 + $0x68] sm:$0xff]
        %v456 = vld [vmem:[#allocation2 + $0x70] sm:$0xff]
        %v457 = vld [vmem:[#allocation2 + $0x78] sm:$0xff]
        %v458 = vld [vmem:[#allocation2 + $0x80] sm:$0xff]
        %v459 = vld [vmem:[#allocation2 + $0x88] sm:$0xff]
        %v460 = vld [vmem:[#allocation2 + $0x90] sm:$0xff]
        %v461 = vld [vmem:[#allocation2 + $0x98] sm:$0xff]
        %v462 = vld [vmem:[%s354] sm:$0xff]
        %v463 = vld [vmem:[%s354 + $0x8] sm:$0xff]
        %v464 = vld [vmem:[%s363] sm:$0xff]
        %v465 = vld [vmem:[%s363 + $0x8] sm:$0xff]
        %v466 = vld [vmem:[%s363 + $0x10] sm:$0xff]
        %v467 = vld [vmem:[%s363 + $0x18] sm:$0xff]
        %v468 = vld [vmem:[%s363 + $0x20] sm:$0xff]
        %v469 = vld [vmem:[%s363 + $0x28] sm:$0xff]
        %v470 = vld [vmem:[%s363 + $0x30] sm:$0xff]
        %v471 = vld [vmem:[%s363 + $0x38] sm:$0xff]
        %v472 = vld [vmem:[%s363 + $0x40] sm:$0xff]
        %v473 = vld [vmem:[%s363 + $0x48] sm:$0xff]
        %v474 = vld [vmem:[%s363 + $0x50] sm:$0xff]
        %v475 = vld [vmem:[%s363 + $0x58] sm:$0xff]
        %v476 = vld [vmem:[%s363 + $0x60] sm:$0xff]
        %v477 = vld [vmem:[%s363 + $0x68] sm:$0xff]
        %v478 = vld [vmem:[%s363 + $0x70] sm:$0xff]
        %v479 = vld [vmem:[%s363 + $0x78] sm:$0xff]
        %v480 = vld [vmem:[%s363 + $0x80] sm:$0xff]
        %v481 = vld [vmem:[%s363 + $0x88] sm:$0xff]
        %v482 = vld [vmem:[%s363 + $0x90] sm:$0xff]
        %v483 = vld [vmem:[%s363 + $0x98] sm:$0xff]
        %v484 = vld [vmem:[%s363 + $0xa0] sm:$0xff]
        %v485 = vld [vmem:[%s363 + $0xa8] sm:$0xff]
        %v486 = vld [vmem:[%s363 + $0xb0] sm:$0xff]
        %v487 = vld [vmem:[%s363 + $0xb8] sm:$0xff]
        %v488 = vld [vmem:[%s363 + $0xc0] sm:$0xff]
        %v489 = vld [vmem:[%s363 + $0xc8] sm:$0xff]
        %v490 = vld [vmem:[%s363 + $0xd0] sm:$0xff]
        %v491 = vld [vmem:[%s363 + $0xd8] sm:$0xff]
        %v492 = vld [vmem:[%s363 + $0xe0] sm:$0xff]
        %v493 = vld [vmem:[%s363 + $0xe8] sm:$0xff]
        %v494 = vld [vmem:[%s363 + $0xf0] sm:$0xff]
        %v495 = vld [vmem:[%s363 + $0xf8] sm:$0xff]
        %v496 = vld [vmem:[%s363 + $0x100] sm:$0xff]
        %v497 = vld [vmem:[%s363 + $0x108] sm:$0xff]
        %v498 = vld [vmem:[%s363 + $0x110] sm:$0xff]
        %v499 = vld [vmem:[%s363 + $0x118] sm:$0xff]
        %v500 = vld [vmem:[%s363 + $0x120] sm:$0xff]
        %v501 = vld [vmem:[%s363 + $0x128] sm:$0xff]
        %v502 = vld [vmem:[%s363 + $0x130] sm:$0xff]
        %v503 = vld [vmem:[%s363 + $0x138] sm:$0xff]
        %v504 = vld [vmem:[%s363 + $0x140] sm:$0xff]
        %v505 = vld [vmem:[%s363 + $0x148] sm:$0xff]
        %v506 = vld [vmem:[%s363 + $0x150] sm:$0xff]
        %v507 = vld [vmem:[%s363 + $0x158] sm:$0xff]
        %v508 = vld [vmem:[%s363 + $0x160] sm:$0xff]
        %v509 = vld [vmem:[%s363 + $0x168] sm:$0xff]
        %v510 = vld [vmem:[%s363 + $0x170] sm:$0xff]
        %v511 = vld [vmem:[%s363 + $0x178] sm:$0xff]
        %v512 = vld [vmem:[%s363 + $0x180] sm:$0xff]
        %v513 = vld [vmem:[%s363 + $0x188] sm:$0xff]
        %v514 = vld [vmem:[%s363 + $0x190] sm:$0xff]
        %v515 = vld [vmem:[%s363 + $0x198] sm:$0xff]
        %v516 = vld [vmem:[%s363 + $0x1a0] sm:$0xff]
        %v517 = vld [vmem:[%s363 + $0x1a8] sm:$0xff]
        %v518 = vld [vmem:[%s363 + $0x1b0] sm:$0xff]
        %v519 = vld [vmem:[%s363 + $0x1b8] sm:$0xff]
        %v520 = vld [vmem:[%s363 + $0x1c0] sm:$0xff]
        %v521 = vld [vmem:[%s363 + $0x1c8] sm:$0xff]
        %v522 = vld [vmem:[%s363 + $0x1d0] sm:$0xff]
        %v523 = vld [vmem:[%s363 + $0x1d8] sm:$0xff]
        %v524 = vld [vmem:[%s363 + $0x1e0] sm:$0xff]
        %v525 = vld [vmem:[%s363 + $0x1e8] sm:$0xff]
        %v526 = vld [vmem:[%s363 + $0x1f0] sm:$0xff]
        %v527 = vld [vmem:[%s363 + $0x1f8] sm:$0xff]
        %v528 = vld [vmem:[%s363 + $0x200] sm:$0xff]
        %v529 = vld [vmem:[%s363 + $0x208] sm:$0xff]
        %v530 = vld [vmem:[%s363 + $0x210] sm:$0xff]
        %v531 = vld [vmem:[%s363 + $0x218] sm:$0xff]
        %v532 = vld [vmem:[%s363 + $0x220] sm:$0xff]
        %v533 = vld [vmem:[%s363 + $0x228] sm:$0xff]
        %v534 = vld [vmem:[%s363 + $0x230] sm:$0xff]
        %v535 = vld [vmem:[%s363 + $0x238] sm:$0xff]
        %v536 = vld [vmem:[%s363 + $0x240] sm:$0xff]
        %v537 = vld [vmem:[%s363 + $0x248] sm:$0xff]
        %v538 = vld [vmem:[%s363 + $0x250] sm:$0xff]
        %v539 = vld [vmem:[%s363 + $0x258] sm:$0xff]
        %v540 = vld [vmem:[%s363 + $0x260] sm:$0xff]
        %v541 = vld [vmem:[%s363 + $0x268] sm:$0xff]
        %v542 = vld [vmem:[%s363 + $0x270] sm:$0xff]
        %v543 = vld [vmem:[%s363 + $0x278] sm:$0xff]
        %v544 = vld [vmem:[%s363 + $0x280] sm:$0xff]
        %v545 = vld [vmem:[%s363 + $0x288] sm:$0xff]
        %v546 = vld [vmem:[%s363 + $0x290] sm:$0xff]
        %v547 = vld [vmem:[%s363 + $0x298] sm:$0xff]
        %v548 = vld [vmem:[%s363 + $0x2a0] sm:$0xff]
        %v549 = vld [vmem:[%s363 + $0x2a8] sm:$0xff]
        %v550 = vld [vmem:[%s363 + $0x2b0] sm:$0xff]
        %v551 = vld [vmem:[%s363 + $0x2b8] sm:$0xff]
        %v552 = vld [vmem:[%s363 + $0x2c0] sm:$0xff]
        %v553 = vld [vmem:[%s363 + $0x2c8] sm:$0xff]
        %v554 = vld [vmem:[%s363 + $0x2d0] sm:$0xff]
        %v555 = vld [vmem:[%s363 + $0x2d8] sm:$0xff]
        %v556 = vld [vmem:[%s363 + $0x2e0] sm:$0xff]
        %v557 = vld [vmem:[%s363 + $0x2e8] sm:$0xff]
        %v558 = vld [vmem:[%s363 + $0x2f0] sm:$0xff]
        %v559 = vld [vmem:[%s363 + $0x2f8] sm:$0xff]
        %v560 = vld [vmem:[%s363 + $0x300] sm:$0xff]
        %v561 = vld [vmem:[%s363 + $0x308] sm:$0xff]
        %v562 = vld [vmem:[%s363 + $0x310] sm:$0xff]
        %v563 = vld [vmem:[%s363 + $0x318] sm:$0xff]
        %v564 = vld [vmem:[%s363 + $0x320] sm:$0xff]
        %v565 = vld [vmem:[%s363 + $0x328] sm:$0xff]
        %v566 = vld [vmem:[%s363 + $0x330] sm:$0xff]
        %v567 = vld [vmem:[%s363 + $0x338] sm:$0xff]
        %v568 = vld [vmem:[%s363 + $0x340] sm:$0xff]
        %v569 = vld [vmem:[%s363 + $0x348] sm:$0xff]
        %v570 = vld [vmem:[%s363 + $0x350] sm:$0xff]
        %v571 = vld [vmem:[%s363 + $0x358] sm:$0xff]
        %v572 = vld [vmem:[%s363 + $0x360] sm:$0xff]
        %v573 = vld [vmem:[%s363 + $0x368] sm:$0xff]
        %v574 = vld [vmem:[%s363 + $0x370] sm:$0xff]
        %v575 = vld [vmem:[%s363 + $0x378] sm:$0xff]
        %v576 = vld [vmem:[%s363 + $0x380] sm:$0xff]
        %v577 = vld [vmem:[%s363 + $0x388] sm:$0xff]
        %v578 = vld [vmem:[%s363 + $0x390] sm:$0xff]
        %v579 = vld [vmem:[%s363 + $0x398] sm:$0xff]
        %v580 = vld [vmem:[%s363 + $0x3a0] sm:$0xff]
        %v581 = vld [vmem:[%s363 + $0x3a8] sm:$0xff]
        %v582 = vld [vmem:[%s363 + $0x3b0] sm:$0xff]
        %v583 = vld [vmem:[%s363 + $0x3b8] sm:$0xff]
        %v584 = vld [vmem:[%s363 + $0x3c0] sm:$0xff]
        %v585 = vld [vmem:[%s363 + $0x3c8] sm:$0xff]
        %v586 = vld [vmem:[%s363 + $0x3d0] sm:$0xff]
        %v587 = vld [vmem:[%s363 + $0x3d8] sm:$0xff]
        %v588 = vld [vmem:[%s363 + $0x3e0] sm:$0xff]
        %v589 = vld [vmem:[%s363 + $0x3e8] sm:$0xff]
        %v590 = vld [vmem:[%s363 + $0x3f0] sm:$0xff]
        %v591 = vld [vmem:[%s363 + $0x3f8] sm:$0xff]
        %v592 = vld [vmem:[%s363 + $0x400] sm:$0xff]
        %v593 = vld [vmem:[%s363 + $0x408] sm:$0xff]
        %v594 = vld [vmem:[%s363 + $0x410] sm:$0xff]
        %v595 = vld [vmem:[%s363 + $0x418] sm:$0xff]
        %v596 = vld [vmem:[%s363 + $0x420] sm:$0xff]
        %v597 = vld [vmem:[%s363 + $0x428] sm:$0xff]
        %v598 = vld [vmem:[%s363 + $0x430] sm:$0xff]
        %v599 = vld [vmem:[%s363 + $0x438] sm:$0xff]
        %v600 = vld [vmem:[%s363 + $0x440] sm:$0xff]
        %v601 = vld [vmem:[%s363 + $0x448] sm:$0xff]
        %v602 = vld [vmem:[%s363 + $0x450] sm:$0xff]
        %v603 = vld [vmem:[%s363 + $0x458] sm:$0xff]
        %v604 = vld [vmem:[%s363 + $0x460] sm:$0xff]
        %v605 = vld [vmem:[%s363 + $0x468] sm:$0xff]
        %v606 = vld [vmem:[%s363 + $0x470] sm:$0xff]
        %v607 = vld [vmem:[%s363 + $0x478] sm:$0xff]
        %v608 = vld [vmem:[%s363 + $0x480] sm:$0xff]
        %v609 = vld [vmem:[%s363 + $0x488] sm:$0xff]
        %v610 = vld [vmem:[%s363 + $0x490] sm:$0xff]
        %v611 = vld [vmem:[%s363 + $0x498] sm:$0xff]
        %v612 = vld [vmem:[%s363 + $0x4a0] sm:$0xff]
        %v613 = vld [vmem:[%s363 + $0x4a8] sm:$0xff]
        %v614 = vld [vmem:[%s363 + $0x4b0] sm:$0xff]
        %v615 = vld [vmem:[%s363 + $0x4b8] sm:$0xff]
        %v616 = vld [vmem:[%s363 + $0x4c0] sm:$0xff]
        %v617 = vld [vmem:[%s363 + $0x4c8] sm:$0xff]
        %v618 = vld [vmem:[%s363 + $0x4d0] sm:$0xff]
        %v619 = vld [vmem:[%s363 + $0x4d8] sm:$0xff]
        %v620 = vld [vmem:[%s363 + $0x4e0] sm:$0xff]
        %v621 = vld [vmem:[%s363 + $0x4e8] sm:$0xff]
        %v622 = vld [vmem:[%s363 + $0x4f0] sm:$0xff]
        %v623 = vld [vmem:[%s363 + $0x4f8] sm:$0xff]
        %v626 = vunpack.c.l.b16 %v462
        %v627 = vunpack.c.h.b16 %v462
        %v628 = vunpack.c.l.b16 %v463
        %v629 = vunpack.c.h.b16 %v463
        %v630 = vpack.c.b16 %v628, %v626
        %v631 = vpack.c.b16 %v629, %v627
        %v794 = vunpack.c.l.b16 %v464
        %v795 = vunpack.c.h.b16 %v464
        %v796 = vunpack.c.l.b16 %v465
        %v797 = vunpack.c.h.b16 %v465
        %v798 = vunpack.c.l.b16 %v466
        %v799 = vunpack.c.h.b16 %v466
        %v800 = vunpack.c.l.b16 %v467
        %v801 = vunpack.c.h.b16 %v467
        %v802 = vunpack.c.l.b16 %v468
        %v803 = vunpack.c.h.b16 %v468
        %v804 = vunpack.c.l.b16 %v469
        %v805 = vunpack.c.h.b16 %v469
        %v806 = vunpack.c.l.b16 %v470
        %v807 = vunpack.c.h.b16 %v470
        %v808 = vunpack.c.l.b16 %v471
        %v809 = vunpack.c.h.b16 %v471
        %v810 = vunpack.c.l.b16 %v472
        %v811 = vunpack.c.h.b16 %v472
        %v812 = vunpack.c.l.b16 %v473
        %v813 = vunpack.c.h.b16 %v473
        %v814 = vunpack.c.l.b16 %v474
        %v815 = vunpack.c.h.b16 %v474
        %v816 = vunpack.c.l.b16 %v475
        %v817 = vunpack.c.h.b16 %v475
        %v818 = vunpack.c.l.b16 %v476
        %v819 = vunpack.c.h.b16 %v476
        %v820 = vunpack.c.l.b16 %v477
        %v821 = vunpack.c.h.b16 %v477
        %v822 = vunpack.c.l.b16 %v478
        %v823 = vunpack.c.h.b16 %v478
        %v824 = vunpack.c.l.b16 %v479
        %v825 = vunpack.c.h.b16 %v479
        %v826 = vunpack.c.l.b16 %v480
        %v827 = vunpack.c.h.b16 %v480
        %v828 = vunpack.c.l.b16 %v481
        %v829 = vunpack.c.h.b16 %v481
        %v830 = vunpack.c.l.b16 %v482
        %v831 = vunpack.c.h.b16 %v482
        %v832 = vunpack.c.l.b16 %v483
        %v833 = vunpack.c.h.b16 %v483
        %v834 = vunpack.c.l.b16 %v484
        %v835 = vunpack.c.h.b16 %v484
        %v836 = vunpack.c.l.b16 %v485
        %v837 = vunpack.c.h.b16 %v485
        %v838 = vunpack.c.l.b16 %v486
        %v839 = vunpack.c.h.b16 %v486
        %v840 = vunpack.c.l.b16 %v487
        %v841 = vunpack.c.h.b16 %v487
        %v842 = vunpack.c.l.b16 %v488
        %v843 = vunpack.c.h.b16 %v488
        %v844 = vunpack.c.l.b16 %v489
        %v845 = vunpack.c.h.b16 %v489
        %v846 = vunpack.c.l.b16 %v490
        %v847 = vunpack.c.h.b16 %v490
        %v848 = vunpack.c.l.b16 %v491
        %v849 = vunpack.c.h.b16 %v491
        %v850 = vunpack.c.l.b16 %v492
        %v851 = vunpack.c.h.b16 %v492
        %v852 = vunpack.c.l.b16 %v493
        %v853 = vunpack.c.h.b16 %v493
        %v854 = vunpack.c.l.b16 %v494
        %v855 = vunpack.c.h.b16 %v494
        %v856 = vunpack.c.l.b16 %v495
        %v857 = vunpack.c.h.b16 %v495
        %v858 = vunpack.c.l.b16 %v496
        %v859 = vunpack.c.h.b16 %v496
        %v860 = vunpack.c.l.b16 %v497
        %v861 = vunpack.c.h.b16 %v497
        %v862 = vunpack.c.l.b16 %v498
        %v863 = vunpack.c.h.b16 %v498
        %v864 = vunpack.c.l.b16 %v499
        %v865 = vunpack.c.h.b16 %v499
        %v866 = vunpack.c.l.b16 %v500
        %v867 = vunpack.c.h.b16 %v500
        %v868 = vunpack.c.l.b16 %v501
        %v869 = vunpack.c.h.b16 %v501
        %v870 = vunpack.c.l.b16 %v502
        %v871 = vunpack.c.h.b16 %v502
        %v872 = vunpack.c.l.b16 %v503
        %v873 = vunpack.c.h.b16 %v503
        %v874 = vunpack.c.l.b16 %v504
        %v875 = vunpack.c.h.b16 %v504
        %v876 = vunpack.c.l.b16 %v505
        %v877 = vunpack.c.h.b16 %v505
        %v878 = vunpack.c.l.b16 %v506
        %v879 = vunpack.c.h.b16 %v506
        %v880 = vunpack.c.l.b16 %v507
        %v881 = vunpack.c.h.b16 %v507
        %v882 = vunpack.c.l.b16 %v508
        %v883 = vunpack.c.h.b16 %v508
        %v884 = vunpack.c.l.b16 %v509
        %v885 = vunpack.c.h.b16 %v509
        %v886 = vunpack.c.l.b16 %v510
        %v887 = vunpack.c.h.b16 %v510
        %v888 = vunpack.c.l.b16 %v511
        %v889 = vunpack.c.h.b16 %v511
        %v890 = vunpack.c.l.b16 %v512
        %v891 = vunpack.c.h.b16 %v512
        %v892 = vunpack.c.l.b16 %v513
        %v893 = vunpack.c.h.b16 %v513
        %v894 = vunpack.c.l.b16 %v514
        %v895 = vunpack.c.h.b16 %v514
        %v896 = vunpack.c.l.b16 %v515
        %v897 = vunpack.c.h.b16 %v515
        %v898 = vunpack.c.l.b16 %v516
        %v899 = vunpack.c.h.b16 %v516
        %v900 = vunpack.c.l.b16 %v517
        %v901 = vunpack.c.h.b16 %v517
        %v902 = vunpack.c.l.b16 %v518
        %v903 = vunpack.c.h.b16 %v518
        %v904 = vunpack.c.l.b16 %v519
        %v905 = vunpack.c.h.b16 %v519
        %v906 = vunpack.c.l.b16 %v520
        %v907 = vunpack.c.h.b16 %v520
        %v908 = vunpack.c.l.b16 %v521
        %v909 = vunpack.c.h.b16 %v521
        %v910 = vunpack.c.l.b16 %v522
        %v911 = vunpack.c.h.b16 %v522
        %v912 = vunpack.c.l.b16 %v523
        %v913 = vunpack.c.h.b16 %v523
        %v914 = vunpack.c.l.b16 %v524
        %v915 = vunpack.c.h.b16 %v524
        %v916 = vunpack.c.l.b16 %v525
        %v917 = vunpack.c.h.b16 %v525
        %v918 = vunpack.c.l.b16 %v526
        %v919 = vunpack.c.h.b16 %v526
        %v920 = vunpack.c.l.b16 %v527
        %v921 = vunpack.c.h.b16 %v527
        %v922 = vunpack.c.l.b16 %v528
        %v923 = vunpack.c.h.b16 %v528
        %v924 = vunpack.c.l.b16 %v529
        %v925 = vunpack.c.h.b16 %v529
        %v926 = vunpack.c.l.b16 %v530
        %v927 = vunpack.c.h.b16 %v530
        %v928 = vunpack.c.l.b16 %v531
        %v929 = vunpack.c.h.b16 %v531
        %v930 = vunpack.c.l.b16 %v532
        %v931 = vunpack.c.h.b16 %v532
        %v932 = vunpack.c.l.b16 %v533
        %v933 = vunpack.c.h.b16 %v533
        %v934 = vunpack.c.l.b16 %v534
        %v935 = vunpack.c.h.b16 %v534
        %v936 = vunpack.c.l.b16 %v535
        %v937 = vunpack.c.h.b16 %v535
        %v938 = vunpack.c.l.b16 %v536
        %v939 = vunpack.c.h.b16 %v536
        %v940 = vunpack.c.l.b16 %v537
        %v941 = vunpack.c.h.b16 %v537
        %v942 = vunpack.c.l.b16 %v538
        %v943 = vunpack.c.h.b16 %v538
        %v944 = vunpack.c.l.b16 %v539
        %v945 = vunpack.c.h.b16 %v539
        %v946 = vunpack.c.l.b16 %v540
        %v947 = vunpack.c.h.b16 %v540
        %v948 = vunpack.c.l.b16 %v541
        %v949 = vunpack.c.h.b16 %v541
        %v950 = vunpack.c.l.b16 %v542
        %v951 = vunpack.c.h.b16 %v542
        %v952 = vunpack.c.l.b16 %v543
        %v953 = vunpack.c.h.b16 %v543
        %v954 = vunpack.c.l.b16 %v544
        %v955 = vunpack.c.h.b16 %v544
        %v956 = vunpack.c.l.b16 %v545
        %v957 = vunpack.c.h.b16 %v545
        %v958 = vunpack.c.l.b16 %v546
        %v959 = vunpack.c.h.b16 %v546
        %v960 = vunpack.c.l.b16 %v547
        %v961 = vunpack.c.h.b16 %v547
        %v962 = vunpack.c.l.b16 %v548
        %v963 = vunpack.c.h.b16 %v548
        %v964 = vunpack.c.l.b16 %v549
        %v965 = vunpack.c.h.b16 %v549
        %v966 = vunpack.c.l.b16 %v550
        %v967 = vunpack.c.h.b16 %v550
        %v968 = vunpack.c.l.b16 %v551
        %v969 = vunpack.c.h.b16 %v551
        %v970 = vunpack.c.l.b16 %v552
        %v971 = vunpack.c.h.b16 %v552
        %v972 = vunpack.c.l.b16 %v553
        %v973 = vunpack.c.h.b16 %v553
        %v974 = vunpack.c.l.b16 %v554
        %v975 = vunpack.c.h.b16 %v554
        %v976 = vunpack.c.l.b16 %v555
        %v977 = vunpack.c.h.b16 %v555
        %v978 = vunpack.c.l.b16 %v556
        %v979 = vunpack.c.h.b16 %v556
        %v980 = vunpack.c.l.b16 %v557
        %v981 = vunpack.c.h.b16 %v557
        %v982 = vunpack.c.l.b16 %v558
        %v983 = vunpack.c.h.b16 %v558
        %v984 = vunpack.c.l.b16 %v559
        %v985 = vunpack.c.h.b16 %v559
        %v986 = vunpack.c.l.b16 %v560
        %v987 = vunpack.c.h.b16 %v560
        %v988 = vunpack.c.l.b16 %v561
        %v989 = vunpack.c.h.b16 %v561
        %v990 = vunpack.c.l.b16 %v562
        %v991 = vunpack.c.h.b16 %v562
        %v992 = vunpack.c.l.b16 %v563
        %v993 = vunpack.c.h.b16 %v563
        %v994 = vunpack.c.l.b16 %v564
        %v995 = vunpack.c.h.b16 %v564
        %v996 = vunpack.c.l.b16 %v565
        %v997 = vunpack.c.h.b16 %v565
        %v998 = vunpack.c.l.b16 %v566
        %v999 = vunpack.c.h.b16 %v566
        %v1000 = vunpack.c.l.b16 %v567
        %v1001 = vunpack.c.h.b16 %v567
        %v1002 = vunpack.c.l.b16 %v568
        %v1003 = vunpack.c.h.b16 %v568
        %v1004 = vunpack.c.l.b16 %v569
        %v1005 = vunpack.c.h.b16 %v569
        %v1006 = vunpack.c.l.b16 %v570
        %v1007 = vunpack.c.h.b16 %v570
        %v1008 = vunpack.c.l.b16 %v571
        %v1009 = vunpack.c.h.b16 %v571
        %v1010 = vunpack.c.l.b16 %v572
        %v1011 = vunpack.c.h.b16 %v572
        %v1012 = vunpack.c.l.b16 %v573
        %v1013 = vunpack.c.h.b16 %v573
        %v1014 = vunpack.c.l.b16 %v574
        %v1015 = vunpack.c.h.b16 %v574
        %v1016 = vunpack.c.l.b16 %v575
        %v1017 = vunpack.c.h.b16 %v575
        %v1018 = vunpack.c.l.b16 %v576
        %v1019 = vunpack.c.h.b16 %v576
        %v1020 = vunpack.c.l.b16 %v577
        %v1021 = vunpack.c.h.b16 %v577
        %v1022 = vunpack.c.l.b16 %v578
        %v1023 = vunpack.c.h.b16 %v578
        %v1024 = vunpack.c.l.b16 %v579
        %v1025 = vunpack.c.h.b16 %v579
        %v1026 = vunpack.c.l.b16 %v580
        %v1027 = vunpack.c.h.b16 %v580
        %v1028 = vunpack.c.l.b16 %v581
        %v1029 = vunpack.c.h.b16 %v581
        %v1030 = vunpack.c.l.b16 %v582
        %v1031 = vunpack.c.h.b16 %v582
        %v1032 = vunpack.c.l.b16 %v583
        %v1033 = vunpack.c.h.b16 %v583
        %v1034 = vunpack.c.l.b16 %v584
        %v1035 = vunpack.c.h.b16 %v584
        %v1036 = vunpack.c.l.b16 %v585
        %v1037 = vunpack.c.h.b16 %v585
        %v1038 = vunpack.c.l.b16 %v586
        %v1039 = vunpack.c.h.b16 %v586
        %v1040 = vunpack.c.l.b16 %v587
        %v1041 = vunpack.c.h.b16 %v587
        %v1042 = vunpack.c.l.b16 %v588
        %v1043 = vunpack.c.h.b16 %v588
        %v1044 = vunpack.c.l.b16 %v589
        %v1045 = vunpack.c.h.b16 %v589
        %v1046 = vunpack.c.l.b16 %v590
        %v1047 = vunpack.c.h.b16 %v590
        %v1048 = vunpack.c.l.b16 %v591
        %v1049 = vunpack.c.h.b16 %v591
        %v1050 = vunpack.c.l.b16 %v592
        %v1051 = vunpack.c.h.b16 %v592
        %v1052 = vunpack.c.l.b16 %v593
        %v1053 = vunpack.c.h.b16 %v593
        %v1054 = vunpack.c.l.b16 %v594
        %v1055 = vunpack.c.h.b16 %v594
        %v1056 = vunpack.c.l.b16 %v595
        %v1057 = vunpack.c.h.b16 %v595
        %v1058 = vunpack.c.l.b16 %v596
        %v1059 = vunpack.c.h.b16 %v596
        %v1060 = vunpack.c.l.b16 %v597
        %v1061 = vunpack.c.h.b16 %v597
        %v1062 = vunpack.c.l.b16 %v598
        %v1063 = vunpack.c.h.b16 %v598
        %v1064 = vunpack.c.l.b16 %v599
        %v1065 = vunpack.c.h.b16 %v599
        %v1066 = vunpack.c.l.b16 %v600
        %v1067 = vunpack.c.h.b16 %v600
        %v1068 = vunpack.c.l.b16 %v601
        %v1069 = vunpack.c.h.b16 %v601
        %v1070 = vunpack.c.l.b16 %v602
        %v1071 = vunpack.c.h.b16 %v602
        %v1072 = vunpack.c.l.b16 %v603
        %v1073 = vunpack.c.h.b16 %v603
        %v1074 = vunpack.c.l.b16 %v604
        %v1075 = vunpack.c.h.b16 %v604
        %v1076 = vunpack.c.l.b16 %v605
        %v1077 = vunpack.c.h.b16 %v605
        %v1078 = vunpack.c.l.b16 %v606
        %v1079 = vunpack.c.h.b16 %v606
        %v1080 = vunpack.c.l.b16 %v607
        %v1081 = vunpack.c.h.b16 %v607
        %v1082 = vunpack.c.l.b16 %v608
        %v1083 = vunpack.c.h.b16 %v608
        %v1084 = vunpack.c.l.b16 %v609
        %v1085 = vunpack.c.h.b16 %v609
        %v1086 = vunpack.c.l.b16 %v610
        %v1087 = vunpack.c.h.b16 %v610
        %v1088 = vunpack.c.l.b16 %v611
        %v1089 = vunpack.c.h.b16 %v611
        %v1090 = vunpack.c.l.b16 %v612
        %v1091 = vunpack.c.h.b16 %v612
        %v1092 = vunpack.c.l.b16 %v613
        %v1093 = vunpack.c.h.b16 %v613
        %v1094 = vunpack.c.l.b16 %v614
        %v1095 = vunpack.c.h.b16 %v614
        %v1096 = vunpack.c.l.b16 %v615
        %v1097 = vunpack.c.h.b16 %v615
        %v1098 = vunpack.c.l.b16 %v616
        %v1099 = vunpack.c.h.b16 %v616
        %v1100 = vunpack.c.l.b16 %v617
        %v1101 = vunpack.c.h.b16 %v617
        %v1102 = vunpack.c.l.b16 %v618
        %v1103 = vunpack.c.h.b16 %v618
        %v1104 = vunpack.c.l.b16 %v619
        %v1105 = vunpack.c.h.b16 %v619
        %v1106 = vunpack.c.l.b16 %v620
        %v1107 = vunpack.c.h.b16 %v620
        %v1108 = vunpack.c.l.b16 %v621
        %v1109 = vunpack.c.h.b16 %v621
        %v1110 = vunpack.c.l.b16 %v622
        %v1111 = vunpack.c.h.b16 %v622
        %v1112 = vunpack.c.l.b16 %v623
        %v1113 = vunpack.c.h.b16 %v623
        %v1114 = vpack.c.b16 %v804, %v794
        %v1115 = vpack.c.b16 %v805, %v795
        %v1116 = vpack.c.b16 %v806, %v796
        %v1117 = vpack.c.b16 %v807, %v797
        %v1118 = vpack.c.b16 %v808, %v798
        %v1119 = vpack.c.b16 %v809, %v799
        %v1120 = vpack.c.b16 %v810, %v800
        %v1121 = vpack.c.b16 %v811, %v801
        %v1122 = vpack.c.b16 %v812, %v802
        %v1123 = vpack.c.b16 %v813, %v803
        %v1124 = vpack.c.b16 %v824, %v814
        %v1125 = vpack.c.b16 %v825, %v815
        %v1126 = vpack.c.b16 %v826, %v816
        %v1127 = vpack.c.b16 %v827, %v817
        %v1128 = vpack.c.b16 %v828, %v818
        %v1129 = vpack.c.b16 %v829, %v819
        %v1130 = vpack.c.b16 %v830, %v820
        %v1131 = vpack.c.b16 %v831, %v821
        %v1132 = vpack.c.b16 %v832, %v822
        %v1133 = vpack.c.b16 %v833, %v823
        %v1134 = vpack.c.b16 %v844, %v834
        %v1135 = vpack.c.b16 %v845, %v835
        %v1136 = vpack.c.b16 %v846, %v836
        %v1137 = vpack.c.b16 %v847, %v837
        %v1138 = vpack.c.b16 %v848, %v838
        %v1139 = vpack.c.b16 %v849, %v839
        %v1140 = vpack.c.b16 %v850, %v840
        %v1141 = vpack.c.b16 %v851, %v841
        %v1142 = vpack.c.b16 %v852, %v842
        %v1143 = vpack.c.b16 %v853, %v843
        %v1144 = vpack.c.b16 %v864, %v854
        %v1145 = vpack.c.b16 %v865, %v855
        %v1146 = vpack.c.b16 %v866, %v856
        %v1147 = vpack.c.b16 %v867, %v857
        %v1148 = vpack.c.b16 %v868, %v858
        %v1149 = vpack.c.b16 %v869, %v859
        %v1150 = vpack.c.b16 %v870, %v860
        %v1151 = vpack.c.b16 %v871, %v861
        %v1152 = vpack.c.b16 %v872, %v862
        %v1153 = vpack.c.b16 %v873, %v863
        %v1154 = vpack.c.b16 %v884, %v874
        %v1155 = vpack.c.b16 %v885, %v875
        %v1156 = vpack.c.b16 %v886, %v876
        %v1157 = vpack.c.b16 %v887, %v877
        %v1158 = vpack.c.b16 %v888, %v878
        %v1159 = vpack.c.b16 %v889, %v879
        %v1160 = vpack.c.b16 %v890, %v880
        %v1161 = vpack.c.b16 %v891, %v881
        %v1162 = vpack.c.b16 %v892, %v882
        %v1163 = vpack.c.b16 %v893, %v883
        %v1164 = vpack.c.b16 %v904, %v894
        %v1165 = vpack.c.b16 %v905, %v895
        %v1166 = vpack.c.b16 %v906, %v896
        %v1167 = vpack.c.b16 %v907, %v897
        %v1168 = vpack.c.b16 %v908, %v898
        %v1169 = vpack.c.b16 %v909, %v899
        %v1170 = vpack.c.b16 %v910, %v900
        %v1171 = vpack.c.b16 %v911, %v901
        %v1172 = vpack.c.b16 %v912, %v902
        %v1173 = vpack.c.b16 %v913, %v903
        %v1174 = vpack.c.b16 %v924, %v914
        %v1175 = vpack.c.b16 %v925, %v915
        %v1176 = vpack.c.b16 %v926, %v916
        %v1177 = vpack.c.b16 %v927, %v917
        %v1178 = vpack.c.b16 %v928, %v918
        %v1179 = vpack.c.b16 %v929, %v919
        %v1180 = vpack.c.b16 %v930, %v920
        %v1181 = vpack.c.b16 %v931, %v921
        %v1182 = vpack.c.b16 %v932, %v922
        %v1183 = vpack.c.b16 %v933, %v923
        %v1184 = vpack.c.b16 %v944, %v934
        %v1185 = vpack.c.b16 %v945, %v935
        %v1186 = vpack.c.b16 %v946, %v936
        %v1187 = vpack.c.b16 %v947, %v937
        %v1188 = vpack.c.b16 %v948, %v938
        %v1189 = vpack.c.b16 %v949, %v939
        %v1190 = vpack.c.b16 %v950, %v940
        %v1191 = vpack.c.b16 %v951, %v941
        %v1192 = vpack.c.b16 %v952, %v942
        %v1193 = vpack.c.b16 %v953, %v943
        %v1194 = vpack.c.b16 %v964, %v954
        %v1195 = vpack.c.b16 %v965, %v955
        %v1196 = vpack.c.b16 %v966, %v956
        %v1197 = vpack.c.b16 %v967, %v957
        %v1198 = vpack.c.b16 %v968, %v958
        %v1199 = vpack.c.b16 %v969, %v959
        %v1200 = vpack.c.b16 %v970, %v960
        %v1201 = vpack.c.b16 %v971, %v961
        %v1202 = vpack.c.b16 %v972, %v962
        %v1203 = vpack.c.b16 %v973, %v963
        %v1204 = vpack.c.b16 %v984, %v974
        %v1205 = vpack.c.b16 %v985, %v975
        %v1206 = vpack.c.b16 %v986, %v976
        %v1207 = vpack.c.b16 %v987, %v977
        %v1208 = vpack.c.b16 %v988, %v978
        %v1209 = vpack.c.b16 %v989, %v979
        %v1210 = vpack.c.b16 %v990, %v980
        %v1211 = vpack.c.b16 %v991, %v981
        %v1212 = vpack.c.b16 %v992, %v982
        %v1213 = vpack.c.b16 %v993, %v983
        %v1214 = vpack.c.b16 %v1004, %v994
        %v1215 = vpack.c.b16 %v1005, %v995
        %v1216 = vpack.c.b16 %v1006, %v996
        %v1217 = vpack.c.b16 %v1007, %v997
        %v1218 = vpack.c.b16 %v1008, %v998
        %v1219 = vpack.c.b16 %v1009, %v999
        %v1220 = vpack.c.b16 %v1010, %v1000
        %v1221 = vpack.c.b16 %v1011, %v1001
        %v1222 = vpack.c.b16 %v1012, %v1002
        %v1223 = vpack.c.b16 %v1013, %v1003
        %v1224 = vpack.c.b16 %v1024, %v1014
        %v1225 = vpack.c.b16 %v1025, %v1015
        %v1226 = vpack.c.b16 %v1026, %v1016
        %v1227 = vpack.c.b16 %v1027, %v1017
        %v1228 = vpack.c.b16 %v1028, %v1018
        %v1229 = vpack.c.b16 %v1029, %v1019
        %v1230 = vpack.c.b16 %v1030, %v1020
        %v1231 = vpack.c.b16 %v1031, %v1021
        %v1232 = vpack.c.b16 %v1032, %v1022
        %v1233 = vpack.c.b16 %v1033, %v1023
        %v1234 = vpack.c.b16 %v1044, %v1034
        %v1235 = vpack.c.b16 %v1045, %v1035
        %v1236 = vpack.c.b16 %v1046, %v1036
        %v1237 = vpack.c.b16 %v1047, %v1037
        %v1238 = vpack.c.b16 %v1048, %v1038
        %v1239 = vpack.c.b16 %v1049, %v1039
        %v1240 = vpack.c.b16 %v1050, %v1040
        %v1241 = vpack.c.b16 %v1051, %v1041
        %v1242 = vpack.c.b16 %v1052, %v1042
        %v1243 = vpack.c.b16 %v1053, %v1043
        %v1244 = vpack.c.b16 %v1064, %v1054
        %v1245 = vpack.c.b16 %v1065, %v1055
        %v1246 = vpack.c.b16 %v1066, %v1056
        %v1247 = vpack.c.b16 %v1067, %v1057
        %v1248 = vpack.c.b16 %v1068, %v1058
        %v1249 = vpack.c.b16 %v1069, %v1059
        %v1250 = vpack.c.b16 %v1070, %v1060
        %v1251 = vpack.c.b16 %v1071, %v1061
        %v1252 = vpack.c.b16 %v1072, %v1062
        %v1253 = vpack.c.b16 %v1073, %v1063
        %v1254 = vpack.c.b16 %v1084, %v1074
        %v1255 = vpack.c.b16 %v1085, %v1075
        %v1256 = vpack.c.b16 %v1086, %v1076
        %v1257 = vpack.c.b16 %v1087, %v1077
        %v1258 = vpack.c.b16 %v1088, %v1078
        %v1259 = vpack.c.b16 %v1089, %v1079
        %v1260 = vpack.c.b16 %v1090, %v1080
        %v1261 = vpack.c.b16 %v1091, %v1081
        %v1262 = vpack.c.b16 %v1092, %v1082
        %v1263 = vpack.c.b16 %v1093, %v1083
        %v1264 = vpack.c.b16 %v1104, %v1094
        %v1265 = vpack.c.b16 %v1105, %v1095
        %v1266 = vpack.c.b16 %v1106, %v1096
        %v1267 = vpack.c.b16 %v1107, %v1097
        %v1268 = vpack.c.b16 %v1108, %v1098
        %v1269 = vpack.c.b16 %v1109, %v1099
        %v1270 = vpack.c.b16 %v1110, %v1100
        %v1271 = vpack.c.b16 %v1111, %v1101
        %v1272 = vpack.c.b16 %v1112, %v1102
        %v1273 = vpack.c.b16 %v1113, %v1103
        %1434 = vmatprep.subr.bf16.mxu0 %v1115
        %1435 = vmatpush1.bf16.msra.mxu0 %v1114
        %1436 = vmatprep.subr.bf16.mxu0 %v1125
        %1437 = vmatpush1.bf16.msra.mxu0 %v1124
        %1438 = vmatprep.subr.bf16.mxu0 %v1135
        %1439 = vmatpush1.bf16.msra.mxu0 %v1134
        %1440 = vmatprep.subr.bf16.mxu0 %v1145
        %1441 = vmatpush1.bf16.msra.mxu0 %v1144
        %1442 = vmatprep.subr.bf16.mxu0 %v1155
        %1443 = vmatpush1.bf16.msra.mxu0 %v1154
        %1444 = vmatprep.subr.bf16.mxu0 %v1165
        %1445 = vmatpush1.bf16.msra.mxu0 %v1164
        %1446 = vmatprep.subr.bf16.mxu0 %v1175
        %1447 = vmatpush1.bf16.msra.mxu0 %v1174
        %1448 = vmatprep.subr.bf16.mxu0 %v1185
        %1449 = vmatpush1.bf16.msra.mxu0 %v1184
        %1450 = vmatprep.subr.bf16.mxu0 %v1195
        %1451 = vmatpush1.bf16.msra.mxu0 %v1194
        %1452 = vmatprep.subr.bf16.mxu0 %v1205
        %1453 = vmatpush1.bf16.msra.mxu0 %v1204
        %1454 = vmatprep.subr.bf16.mxu0 %v1215
        %1455 = vmatpush1.bf16.msra.mxu0 %v1214
        %1456 = vmatprep.subr.bf16.mxu0 %v1225
        %1457 = vmatpush1.bf16.msra.mxu0 %v1224
        %1458 = vmatprep.subr.bf16.mxu0 %v1235
        %1459 = vmatpush1.bf16.msra.mxu0 %v1234
        %1460 = vmatprep.subr.bf16.mxu0 %v1245
        %1461 = vmatpush1.bf16.msra.mxu0 %v1244
        %1462 = vmatprep.subr.bf16.mxu0 %v1255
        %1463 = vmatpush1.bf16.msra.mxu0 %v1254
        %1464 = vmatprep.subr.bf16.mxu0 %v1265
        %1465 = vmatpush1.bf16.msra.mxu0 %v1264
        %1466 = vmatprep.mubr.bf16.mxu0 %v631
        %1467 = vmatmul.mubr.bf16.gmra.mrb[0].mxu0 %v630
        %v1468 = vpop.f32.mrb[0].mxu0
        %v1469 = vadd.f32 0.0, %v1468
        %v1470 = vpop.f32.mrb[0].mxu0
        %v1471 = vadd.f32 0.0, %v1470
        %v1472 = vpop.f32.mrb[0].mxu0
        %v1473 = vadd.f32 0.0, %v1472
        %v1474 = vpop.f32.mrb[0].mxu0
        %v1475 = vadd.f32 0.0, %v1474
        %1476 = vdwg.mxu0
        %1477 = vmatprep.subr.bf16.mxu0 %v1117
        %1478 = vmatpush1.bf16.msra.mxu0 %v1116
        %1479 = vmatprep.subr.bf16.mxu0 %v1127
        %1480 = vmatpush1.bf16.msra.mxu0 %v1126
        %1481 = vmatprep.subr.bf16.mxu0 %v1137
        %1482 = vmatpush1.bf16.msra.mxu0 %v1136
        %1483 = vmatprep.subr.bf16.mxu0 %v1147
        %1484 = vmatpush1.bf16.msra.mxu0 %v1146
        %1485 = vmatprep.subr.bf16.mxu0 %v1157
        %1486 = vmatpush1.bf16.msra.mxu0 %v1156
        %1487 = vmatprep.subr.bf16.mxu0 %v1167
        %1488 = vmatpush1.bf16.msra.mxu0 %v1166
        %1489 = vmatprep.subr.bf16.mxu0 %v1177
        %1490 = vmatpush1.bf16.msra.mxu0 %v1176
        %1491 = vmatprep.subr.bf16.mxu0 %v1187
        %1492 = vmatpush1.bf16.msra.mxu0 %v1186
        %1493 = vmatprep.subr.bf16.mxu0 %v1197
        %1494 = vmatpush1.bf16.msra.mxu0 %v1196
        %1495 = vmatprep.subr.bf16.mxu0 %v1207
        %1496 = vmatpush1.bf16.msra.mxu0 %v1206
        %1497 = vmatprep.subr.bf16.mxu0 %v1217
        %1498 = vmatpush1.bf16.msra.mxu0 %v1216
        %1499 = vmatprep.subr.bf16.mxu0 %v1227
        %1500 = vmatpush1.bf16.msra.mxu0 %v1226
        %1501 = vmatprep.subr.bf16.mxu0 %v1237
        %1502 = vmatpush1.bf16.msra.mxu0 %v1236
        %1503 = vmatprep.subr.bf16.mxu0 %v1247
        %1504 = vmatpush1.bf16.msra.mxu0 %v1246
        %1505 = vmatprep.subr.bf16.mxu0 %v1257
        %1506 = vmatpush1.bf16.msra.mxu0 %v1256
        %1507 = vmatprep.subr.bf16.mxu0 %v1267
        %1508 = vmatpush1.bf16.msra.mxu0 %v1266
        %1509 = vmatprep.mubr.bf16.mxu0 %v631
        %1510 = vmatmul.mubr.bf16.gmra.mrb[0].mxu0 %v630
        %v1511 = vpop.f32.mrb[0].mxu0
        %v1512 = vadd.f32 0.0, %v1511
        %v1513 = vpop.f32.mrb[0].mxu0
        %v1514 = vadd.f32 0.0, %v1513
        %v1515 = vpop.f32.mrb[0].mxu0
        %v1516 = vadd.f32 0.0, %v1515
        %v1517 = vpop.f32.mrb[0].mxu0
        %v1518 = vadd.f32 0.0, %v1517
        %1519 = vdwg.mxu0
        %1520 = vmatprep.subr.bf16.mxu0 %v1119
        %1521 = vmatpush1.bf16.msra.mxu0 %v1118
        %1522 = vmatprep.subr.bf16.mxu0 %v1129
        %1523 = vmatpush1.bf16.msra.mxu0 %v1128
        %1524 = vmatprep.subr.bf16.mxu0 %v1139
        %1525 = vmatpush1.bf16.msra.mxu0 %v1138
        %1526 = vmatprep.subr.bf16.mxu0 %v1149
        %1527 = vmatpush1.bf16.msra.mxu0 %v1148
        %1528 = vmatprep.subr.bf16.mxu0 %v1159
        %1529 = vmatpush1.bf16.msra.mxu0 %v1158
        %1530 = vmatprep.subr.bf16.mxu0 %v1169
        %1531 = vmatpush1.bf16.msra.mxu0 %v1168
        %1532 = vmatprep.subr.bf16.mxu0 %v1179
        %1533 = vmatpush1.bf16.msra.mxu0 %v1178
        %1534 = vmatprep.subr.bf16.mxu0 %v1189
        %1535 = vmatpush1.bf16.msra.mxu0 %v1188
        %1536 = vmatprep.subr.bf16.mxu0 %v1199
        %1537 = vmatpush1.bf16.msra.mxu0 %v1198
        %1538 = vmatprep.subr.bf16.mxu0 %v1209
        %1539 = vmatpush1.bf16.msra.mxu0 %v1208
        %1540 = vmatprep.subr.bf16.mxu0 %v1219
        %1541 = vmatpush1.bf16.msra.mxu0 %v1218
        %1542 = vmatprep.subr.bf16.mxu0 %v1229
        %1543 = vmatpush1.bf16.msra.mxu0 %v1228
        %1544 = vmatprep.subr.bf16.mxu0 %v1239
        %1545 = vmatpush1.bf16.msra.mxu0 %v1238
        %1546 = vmatprep.subr.bf16.mxu0 %v1249
        %1547 = vmatpush1.bf16.msra.mxu0 %v1248
        %1548 = vmatprep.subr.bf16.mxu0 %v1259
        %1549 = vmatpush1.bf16.msra.mxu0 %v1258
        %1550 = vmatprep.subr.bf16.mxu0 %v1269
        %1551 = vmatpush1.bf16.msra.mxu0 %v1268
        %1552 = vmatprep.mubr.bf16.mxu0 %v631
        %1553 = vmatmul.mubr.bf16.gmra.mrb[0].mxu0 %v630
        %v1554 = vpop.f32.mrb[0].mxu0
        %v1555 = vadd.f32 0.0, %v1554
        %v1556 = vpop.f32.mrb[0].mxu0
        %v1557 = vadd.f32 0.0, %v1556
        %v1558 = vpop.f32.mrb[0].mxu0
        %v1559 = vadd.f32 0.0, %v1558
        %v1560 = vpop.f32.mrb[0].mxu0
        %v1561 = vadd.f32 0.0, %v1560
        %1562 = vdwg.mxu0
        %1563 = vmatprep.subr.bf16.mxu0 %v1121
        %1564 = vmatpush1.bf16.msra.mxu0 %v1120
        %1565 = vmatprep.subr.bf16.mxu0 %v1131
        %1566 = vmatpush1.bf16.msra.mxu0 %v1130
        %1567 = vmatprep.subr.bf16.mxu0 %v1141
        %1568 = vmatpush1.bf16.msra.mxu0 %v1140
        %1569 = vmatprep.subr.bf16.mxu0 %v1151
        %1570 = vmatpush1.bf16.msra.mxu0 %v1150
        %1571 = vmatprep.subr.bf16.mxu0 %v1161
        %1572 = vmatpush1.bf16.msra.mxu0 %v1160
        %1573 = vmatprep.subr.bf16.mxu0 %v1171
        %1574 = vmatpush1.bf16.msra.mxu0 %v1170
        %1575 = vmatprep.subr.bf16.mxu0 %v1181
        %1576 = vmatpush1.bf16.msra.mxu0 %v1180
        %1577 = vmatprep.subr.bf16.mxu0 %v1191
        %1578 = vmatpush1.bf16.msra.mxu0 %v1190
        %1579 = vmatprep.subr.bf16.mxu0 %v1201
        %1580 = vmatpush1.bf16.msra.mxu0 %v1200
        %1581 = vmatprep.subr.bf16.mxu0 %v1211
        %1582 = vmatpush1.bf16.msra.mxu0 %v1210
        %1583 = vmatprep.subr.bf16.mxu0 %v1221
        %1584 = vmatpush1.bf16.msra.mxu0 %v1220
        %1585 = vmatprep.subr.bf16.mxu0 %v1231
        %1586 = vmatpush1.bf16.msra.mxu0 %v1230
        %1587 = vmatprep.subr.bf16.mxu0 %v1241
        %1588 = vmatpush1.bf16.msra.mxu0 %v1240
        %1589 = vmatprep.subr.bf16.mxu0 %v1251
        %1590 = vmatpush1.bf16.msra.mxu0 %v1250
        %1591 = vmatprep.subr.bf16.mxu0 %v1261
        %1592 = vmatpush1.bf16.msra.mxu0 %v1260
        %1593 = vmatprep.subr.bf16.mxu0 %v1271
        %1594 = vmatpush1.bf16.msra.mxu0 %v1270
        %1595 = vmatprep.mubr.bf16.mxu0 %v631
        %1596 = vmatmul.mubr.bf16.gmra.mrb[0].mxu0 %v630
        %v1597 = vpop.f32.mrb[0].mxu0
        %v1598 = vadd.f32 0.0, %v1597
        %v1599 = vpop.f32.mrb[0].mxu0
        %v1600 = vadd.f32 0.0, %v1599
        %v1601 = vpop.f32.mrb[0].mxu0
        %v1602 = vadd.f32 0.0, %v1601
        %v1603 = vpop.f32.mrb[0].mxu0
        %v1604 = vadd.f32 0.0, %v1603
        %1605 = vdwg.mxu0
        %1606 = vmatprep.subr.bf16.mxu0 %v1123
        %1607 = vmatpush1.bf16.msra.mxu0 %v1122
        %1608 = vmatprep.subr.bf16.mxu0 %v1133
        %1609 = vmatpush1.bf16.msra.mxu0 %v1132
        %1610 = vmatprep.subr.bf16.mxu0 %v1143
        %1611 = vmatpush1.bf16.msra.mxu0 %v1142
        %1612 = vmatprep.subr.bf16.mxu0 %v1153
        %1613 = vmatpush1.bf16.msra.mxu0 %v1152
        %1614 = vmatprep.subr.bf16.mxu0 %v1163
        %1615 = vmatpush1.bf16.msra.mxu0 %v1162
        %1616 = vmatprep.subr.bf16.mxu0 %v1173
        %1617 = vmatpush1.bf16.msra.mxu0 %v1172
        %1618 = vmatprep.subr.bf16.mxu0 %v1183
        %1619 = vmatpush1.bf16.msra.mxu0 %v1182
        %1620 = vmatprep.subr.bf16.mxu0 %v1193
        %1621 = vmatpush1.bf16.msra.mxu0 %v1192
        %1622 = vmatprep.subr.bf16.mxu0 %v1203
        %1623 = vmatpush1.bf16.msra.mxu0 %v1202
        %1624 = vmatprep.subr.bf16.mxu0 %v1213
        %1625 = vmatpush1.bf16.msra.mxu0 %v1212
        %1626 = vmatprep.subr.bf16.mxu0 %v1223
        %1627 = vmatpush1.bf16.msra.mxu0 %v1222
        %1628 = vmatprep.subr.bf16.mxu0 %v1233
        %1629 = vmatpush1.bf16.msra.mxu0 %v1232
        %1630 = vmatprep.subr.bf16.mxu0 %v1243
        %1631 = vmatpush1.bf16.msra.mxu0 %v1242
        %1632 = vmatprep.subr.bf16.mxu0 %v1253
        %1633 = vmatpush1.bf16.msra.mxu0 %v1252
        %1634 = vmatprep.subr.bf16.mxu0 %v1263
        %1635 = vmatpush1.bf16.msra.mxu0 %v1262
        %1636 = vmatprep.subr.bf16.mxu0 %v1273
        %1637 = vmatpush1.bf16.msra.mxu0 %v1272
        %1638 = vmatprep.mubr.bf16.mxu0 %v631
        %1639 = vmatmul.mubr.bf16.gmra.mrb[0].mxu0 %v630
        %v1640 = vpop.f32.mrb[0].mxu0
        %v1641 = vadd.f32 0.0, %v1640
        %v1642 = vpop.f32.mrb[0].mxu0
        %v1643 = vadd.f32 0.0, %v1642
        %v1644 = vpop.f32.mrb[0].mxu0
        %v1645 = vadd.f32 0.0, %v1644
        %v1646 = vpop.f32.mrb[0].mxu0
        %v1647 = vadd.f32 0.0, %v1646
        %1648 = vdwg.mxu0
        %v1649 = vadd.f32 %v442, %v1469
        %v1650 = vadd.f32 %v443, %v1471
        %v1651 = vadd.f32 %v444, %v1512
        %v1652 = vadd.f32 %v445, %v1514
        %v1653 = vadd.f32 %v446, %v1555
        %v1654 = vadd.f32 %v447, %v1557
        %v1655 = vadd.f32 %v448, %v1598
        %v1656 = vadd.f32 %v449, %v1600
        %v1657 = vadd.f32 %v450, %v1641
        %v1658 = vadd.f32 %v451, %v1643
        %v1659 = vadd.f32 %v452, %v1473
        %v1660 = vadd.f32 %v453, %v1475
        %v1661 = vadd.f32 %v454, %v1516
        %v1662 = vadd.f32 %v455, %v1518
        %v1663 = vadd.f32 %v456, %v1559
        %v1664 = vadd.f32 %v457, %v1561
        %v1665 = vadd.f32 %v458, %v1602
        %v1666 = vadd.f32 %v459, %v1604
        %v1667 = vadd.f32 %v460, %v1645
        %v1668 = vadd.f32 %v461, %v1647
        %1669 = vst [vmem:[#allocation2] sm:$0xff] %v1649
        %1670 = vst [vmem:[#allocation2 + $0x8] sm:$0xff] %v1650
        %1671 = vst [vmem:[#allocation2 + $0x10] sm:$0xff] %v1651
        %1672 = vst [vmem:[#allocation2 + $0x18] sm:$0xff] %v1652
        %1673 = vst [vmem:[#allocation2 + $0x20] sm:$0xff] %v1653
        %1674 = vst [vmem:[#allocation2 + $0x28] sm:$0xff] %v1654
        %1675 = vst [vmem:[#allocation2 + $0x30] sm:$0xff] %v1655
        %1676 = vst [vmem:[#allocation2 + $0x38] sm:$0xff] %v1656
        %1677 = vst [vmem:[#allocation2 + $0x40] sm:$0xff] %v1657
        %1678 = vst [vmem:[#allocation2 + $0x48] sm:$0xff] %v1658
        %1679 = vst [vmem:[#allocation2 + $0x50] sm:$0xff] %v1659
        %1680 = vst [vmem:[#allocation2 + $0x58] sm:$0xff] %v1660
        %1681 = vst [vmem:[#allocation2 + $0x60] sm:$0xff] %v1661
        %1682 = vst [vmem:[#allocation2 + $0x68] sm:$0xff] %v1662
        %1683 = vst [vmem:[#allocation2 + $0x70] sm:$0xff] %v1663
        %1684 = vst [vmem:[#allocation2 + $0x78] sm:$0xff] %v1664
        %1685 = vst [vmem:[#allocation2 + $0x80] sm:$0xff] %v1665
        %1686 = vst [vmem:[#allocation2 + $0x88] sm:$0xff] %v1666
        %1687 = vst [vmem:[#allocation2 + $0x90] sm:$0xff] %v1667
        %1688 = vst [vmem:[#allocation2 + $0x98] sm:$0xff] %v1668
        %p1689 = scmp.eq.s32.totalorder %s32, 2
        // Predicated region
        $region81: #{_run_fused.1} parent=47 // pred_check
          %p1690 = pneg %p1689
        $region82: #{_run_fused.1} parent=47 // pred_check_branch
          %1692 = sbr.rel (%p1690) target = $region84
        $region83: #{_run_fused.1} parent=47 // pred_region
          %v1693 = vld [vmem:[#allocation2] sm:$0xff]
          %v1694 = vld [vmem:[#allocation2 + $0x8] sm:$0xff]
          %v1695 = vld [vmem:[#allocation2 + $0x10] sm:$0xff]
          %v1696 = vld [vmem:[#allocation2 + $0x18] sm:$0xff]
          %v1697 = vld [vmem:[#allocation2 + $0x20] sm:$0xff]
          %v1698 = vld [vmem:[#allocation2 + $0x28] sm:$0xff]
          %v1699 = vld [vmem:[#allocation2 + $0x30] sm:$0xff]
          %v1700 = vld [vmem:[#allocation2 + $0x38] sm:$0xff]
          %v1701 = vld [vmem:[#allocation2 + $0x40] sm:$0xff]
          %v1702 = vld [vmem:[#allocation2 + $0x48] sm:$0xff]
          %v1703 = vld [vmem:[#allocation2 + $0x50] sm:$0xff]
          %v1704 = vld [vmem:[#allocation2 + $0x58] sm:$0xff]
          %v1705 = vld [vmem:[#allocation2 + $0x60] sm:$0xff]
          %v1706 = vld [vmem:[#allocation2 + $0x68] sm:$0xff]
          %v1707 = vld [vmem:[#allocation2 + $0x70] sm:$0xff]
          %v1708 = vld [vmem:[#allocation2 + $0x78] sm:$0xff]
          %v1709 = vld [vmem:[#allocation2 + $0x80] sm:$0xff]
          %v1710 = vld [vmem:[#allocation2 + $0x88] sm:$0xff]
          %v1711 = vld [vmem:[#allocation2 + $0x90] sm:$0xff]
          %v1712 = vld [vmem:[#allocation2 + $0x98] sm:$0xff]
          %v1713 = vld [vmem:[#allocation8] sm:$0xff]
          %v1714 = vld [vmem:[#allocation8 + $0x8] sm:$0x3]
          %v1717 = vlaneseq
          %v1718 = vshrl.u32 %v1717, 7
          %v1719 = vsub.s32 0, %v1718
          %v1720 = vrot.slane %v1713, %v1719
          %v1721 = vlaneseq
          %v1722 = vshrl.u32 %v1721, 7
          %v1723 = vsub.s32 1, %v1722
          %v1724 = vrot.slane %v1713, %v1723
          %v1725 = vlaneseq
          %v1726 = vshrl.u32 %v1725, 7
          %v1727 = vsub.s32 2, %v1726
          %v1728 = vrot.slane %v1713, %v1727
          %v1729 = vlaneseq
          %v1730 = vshrl.u32 %v1729, 7
          %v1731 = vsub.s32 3, %v1730
          %v1732 = vrot.slane %v1713, %v1731
          %v1733 = vlaneseq
          %v1734 = vshrl.u32 %v1733, 7
          %v1735 = vsub.s32 4, %v1734
          %v1736 = vrot.slane %v1713, %v1735
          %v1737 = vlaneseq
          %v1738 = vshrl.u32 %v1737, 7
          %v1739 = vsub.s32 5, %v1738
          %v1740 = vrot.slane %v1713, %v1739
          %v1741 = vlaneseq
          %v1742 = vshrl.u32 %v1741, 7
          %v1743 = vsub.s32 6, %v1742
          %v1744 = vrot.slane %v1713, %v1743
          %v1745 = vlaneseq
          %v1746 = vshrl.u32 %v1745, 7
          %v1747 = vsub.s32 7, %v1746
          %v1748 = vrot.slane %v1713, %v1747
          %v1749 = vlaneseq
          %v1750 = vshrl.u32 %v1749, 7
          %v1751 = vsub.s32 0, %v1750
          %v1752 = vrot.slane %v1714, %v1751
          %v1753 = vlaneseq
          %v1754 = vshrl.u32 %v1753, 7
          %v1755 = vsub.s32 1, %v1754
          %v1756 = vrot.slane %v1714, %v1755
          %v1767 = vadd.f32 %v1693, %v1720
          %v1768 = vadd.f32 %v1694, %v1724
          %v1769 = vadd.f32 %v1695, %v1728
          %v1770 = vadd.f32 %v1696, %v1732
          %v1771 = vadd.f32 %v1697, %v1736
          %v1772 = vadd.f32 %v1698, %v1740
          %v1773 = vadd.f32 %v1699, %v1744
          %v1774 = vadd.f32 %v1700, %v1748
          %v1775 = vadd.f32 %v1701, %v1752
          %v1776 = vadd.f32 %v1702, %v1756
          %v1777 = vadd.f32 %v1703, %v1720
          %v1778 = vadd.f32 %v1704, %v1724
          %v1779 = vadd.f32 %v1705, %v1728
          %v1780 = vadd.f32 %v1706, %v1732
          %v1781 = vadd.f32 %v1707, %v1736
          %v1782 = vadd.f32 %v1708, %v1740
          %v1783 = vadd.f32 %v1709, %v1744
          %v1784 = vadd.f32 %v1710, %v1748
          %v1785 = vadd.f32 %v1711, %v1752
          %v1786 = vadd.f32 %v1712, %v1756
          %v1787 = vmax.f32 %v1767, 0.0
          %v1788 = vmax.f32 %v1768, 0.0
          %v1789 = vmax.f32 %v1769, 0.0
          %v1790 = vmax.f32 %v1770, 0.0
          %v1791 = vmax.f32 %v1771, 0.0
          %v1792 = vmax.f32 %v1772, 0.0
          %v1793 = vmax.f32 %v1773, 0.0
          %v1794 = vmax.f32 %v1774, 0.0
          %v1795 = vmax.f32 %v1775, 0.0
          %v1796 = vmax.f32 %v1776, 0.0
          %v1797 = vmax.f32 %v1777, 0.0
          %v1798 = vmax.f32 %v1778, 0.0
          %v1799 = vmax.f32 %v1779, 0.0
          %v1800 = vmax.f32 %v1780, 0.0
          %v1801 = vmax.f32 %v1781, 0.0
          %v1802 = vmax.f32 %v1782, 0.0
          %v1803 = vmax.f32 %v1783, 0.0
          %v1804 = vmax.f32 %v1784, 0.0
          %v1805 = vmax.f32 %v1785, 0.0
          %v1806 = vmax.f32 %v1786, 0.0
          %v1807 = vld [vmem:[#allocation9] sm:$0xff]
          %v1808 = vld [vmem:[#allocation9 + $0x8] sm:$0xff]
          %v1809 = vld [vmem:[#allocation9 + $0x10] sm:$0xff]
          %v1810 = vld [vmem:[#allocation9 + $0x18] sm:$0xff]
          %v1811 = vld [vmem:[#allocation9 + $0x20] sm:$0xff]
          %v1812 = vld [vmem:[#allocation9 + $0x28] sm:$0xff]
          %v1813 = vld [vmem:[#allocation9 + $0x30] sm:$0xff]
          %v1814 = vld [vmem:[#allocation9 + $0x38] sm:$0xff]
          %v1815 = vld [vmem:[#allocation9 + $0x40] sm:$0xff]
          %v1816 = vld [vmem:[#allocation9 + $0x48] sm:$0xff]
          %v1817 = vld [vmem:[#allocation9 + $0x50] sm:$0xff]
          %v1818 = vld [vmem:[#allocation9 + $0x58] sm:$0xff]
          %v1819 = vld [vmem:[#allocation9 + $0x60] sm:$0xff]
          %v1820 = vld [vmem:[#allocation9 + $0x68] sm:$0xff]
          %v1821 = vld [vmem:[#allocation9 + $0x70] sm:$0xff]
          %v1822 = vld [vmem:[#allocation9 + $0x78] sm:$0xff]
          %v1823 = vld [vmem:[#allocation9 + $0x80] sm:$0xff]
          %v1824 = vld [vmem:[#allocation9 + $0x88] sm:$0xff]
          %v1825 = vld [vmem:[#allocation9 + $0x90] sm:$0xff]
          %v1826 = vld [vmem:[#allocation9 + $0x98] sm:$0xff]
          %v1827 = vld [vmem:[#allocation9 + $0xa0] sm:$0xff]
          %v1828 = vld [vmem:[#allocation9 + $0xa8] sm:$0xff]
          %v1829 = vld [vmem:[#allocation9 + $0xb0] sm:$0xff]
          %v1830 = vld [vmem:[#allocation9 + $0xb8] sm:$0xff]
          %v1831 = vld [vmem:[#allocation9 + $0xc0] sm:$0xff]
          %v1832 = vld [vmem:[#allocation9 + $0xc8] sm:$0xff]
          %v1833 = vld [vmem:[#allocation9 + $0xd0] sm:$0xff]
          %v1834 = vld [vmem:[#allocation9 + $0xd8] sm:$0xff]
          %v1835 = vld [vmem:[#allocation9 + $0xe0] sm:$0xff]
          %v1836 = vld [vmem:[#allocation9 + $0xe8] sm:$0xff]
          %v1837 = vld [vmem:[#allocation9 + $0xf0] sm:$0xff]
          %v1838 = vld [vmem:[#allocation9 + $0xf8] sm:$0xff]
          %v1839 = vld [vmem:[#allocation9 + $0x100] sm:$0xff]
          %v1840 = vld [vmem:[#allocation9 + $0x108] sm:$0xff]
          %v1841 = vld [vmem:[#allocation9 + $0x110] sm:$0xff]
          %v1842 = vld [vmem:[#allocation9 + $0x118] sm:$0xff]
          %v1843 = vld [vmem:[#allocation9 + $0x120] sm:$0xff]
          %v1844 = vld [vmem:[#allocation9 + $0x128] sm:$0xff]
          %v1845 = vld [vmem:[#allocation9 + $0x130] sm:$0xff]
          %v1846 = vld [vmem:[#allocation9 + $0x138] sm:$0xff]
          %v1847 = vld [vmem:[#allocation9 + $0x140] sm:$0xff]
          %v1848 = vld [vmem:[#allocation9 + $0x148] sm:$0xff]
          %v1849 = vld [vmem:[#allocation9 + $0x150] sm:$0xff]
          %v1850 = vld [vmem:[#allocation9 + $0x158] sm:$0xff]
          %v1851 = vld [vmem:[#allocation9 + $0x160] sm:$0xff]
          %v1852 = vld [vmem:[#allocation9 + $0x168] sm:$0xff]
          %v1853 = vld [vmem:[#allocation9 + $0x170] sm:$0xff]
          %v1854 = vld [vmem:[#allocation9 + $0x178] sm:$0xff]
          %v1855 = vld [vmem:[#allocation9 + $0x180] sm:$0xff]
          %v1856 = vld [vmem:[#allocation9 + $0x188] sm:$0xff]
          %v1857 = vld [vmem:[#allocation9 + $0x190] sm:$0xff]
          %v1858 = vld [vmem:[#allocation9 + $0x198] sm:$0xff]
          %v1859 = vld [vmem:[#allocation9 + $0x1a0] sm:$0xff]
          %v1860 = vld [vmem:[#allocation9 + $0x1a8] sm:$0xff]
          %v1861 = vld [vmem:[#allocation9 + $0x1b0] sm:$0xff]
          %v1862 = vld [vmem:[#allocation9 + $0x1b8] sm:$0xff]
          %v1863 = vld [vmem:[#allocation9 + $0x1c0] sm:$0xff]
          %v1864 = vld [vmem:[#allocation9 + $0x1c8] sm:$0xff]
          %v1865 = vld [vmem:[#allocation9 + $0x1d0] sm:$0xff]
          %v1866 = vld [vmem:[#allocation9 + $0x1d8] sm:$0xff]
          %v1867 = vld [vmem:[#allocation9 + $0x1e0] sm:$0xff]
          %v1868 = vld [vmem:[#allocation9 + $0x1e8] sm:$0xff]
          %v1869 = vld [vmem:[#allocation9 + $0x1f0] sm:$0xff]
          %v1870 = vld [vmem:[#allocation9 + $0x1f8] sm:$0xff]
          %v1871 = vld [vmem:[#allocation9 + $0x200] sm:$0xff]
          %v1872 = vld [vmem:[#allocation9 + $0x208] sm:$0xff]
          %v1873 = vld [vmem:[#allocation9 + $0x210] sm:$0xff]
          %v1874 = vld [vmem:[#allocation9 + $0x218] sm:$0xff]
          %v1875 = vld [vmem:[#allocation9 + $0x220] sm:$0xff]
          %v1876 = vld [vmem:[#allocation9 + $0x228] sm:$0xff]
          %v1877 = vld [vmem:[#allocation9 + $0x230] sm:$0xff]
          %v1878 = vld [vmem:[#allocation9 + $0x238] sm:$0xff]
          %v1879 = vld [vmem:[#allocation9 + $0x240] sm:$0xff]
          %v1880 = vld [vmem:[#allocation9 + $0x248] sm:$0xff]
          %v1881 = vld [vmem:[#allocation9 + $0x250] sm:$0xff]
          %v1882 = vld [vmem:[#allocation9 + $0x258] sm:$0xff]
          %v1883 = vld [vmem:[#allocation9 + $0x260] sm:$0xff]
          %v1884 = vld [vmem:[#allocation9 + $0x268] sm:$0xff]
          %v1885 = vld [vmem:[#allocation9 + $0x270] sm:$0xff]
          %v1886 = vld [vmem:[#allocation9 + $0x278] sm:$0xff]
          %v1887 = vld [vmem:[#allocation9 + $0x280] sm:$0xff]
          %v1888 = vld [vmem:[#allocation9 + $0x288] sm:$0xff]
          %v1889 = vld [vmem:[#allocation9 + $0x290] sm:$0xff]
          %v1890 = vld [vmem:[#allocation9 + $0x298] sm:$0xff]
          %v1891 = vld [vmem:[#allocation9 + $0x2a0] sm:$0xff]
          %v1892 = vld [vmem:[#allocation9 + $0x2a8] sm:$0xff]
          %v1893 = vld [vmem:[#allocation9 + $0x2b0] sm:$0xff]
          %v1894 = vld [vmem:[#allocation9 + $0x2b8] sm:$0xff]
          %v1895 = vld [vmem:[#allocation9 + $0x2c0] sm:$0xff]
          %v1896 = vld [vmem:[#allocation9 + $0x2c8] sm:$0xff]
          %v1897 = vld [vmem:[#allocation9 + $0x2d0] sm:$0xff]
          %v1898 = vld [vmem:[#allocation9 + $0x2d8] sm:$0xff]
          %v1899 = vld [vmem:[#allocation9 + $0x2e0] sm:$0xff]
          %v1900 = vld [vmem:[#allocation9 + $0x2e8] sm:$0xff]
          %v1901 = vld [vmem:[#allocation9 + $0x2f0] sm:$0xff]
          %v1902 = vld [vmem:[#allocation9 + $0x2f8] sm:$0xff]
          %v1903 = vld [vmem:[#allocation9 + $0x300] sm:$0xff]
          %v1904 = vld [vmem:[#allocation9 + $0x308] sm:$0xff]
          %v1905 = vld [vmem:[#allocation9 + $0x310] sm:$0xff]
          %v1906 = vld [vmem:[#allocation9 + $0x318] sm:$0xff]
          %v1907 = vld [vmem:[#allocation9 + $0x320] sm:$0xff]
          %v1908 = vld [vmem:[#allocation9 + $0x328] sm:$0xff]
          %v1909 = vld [vmem:[#allocation9 + $0x330] sm:$0xff]
          %v1910 = vld [vmem:[#allocation9 + $0x338] sm:$0xff]
          %v1911 = vld [vmem:[#allocation9 + $0x340] sm:$0xff]
          %v1912 = vld [vmem:[#allocation9 + $0x348] sm:$0xff]
          %v1913 = vld [vmem:[#allocation9 + $0x350] sm:$0xff]
          %v1914 = vld [vmem:[#allocation9 + $0x358] sm:$0xff]
          %v1915 = vld [vmem:[#allocation9 + $0x360] sm:$0xff]
          %v1916 = vld [vmem:[#allocation9 + $0x368] sm:$0xff]
          %v1917 = vld [vmem:[#allocation9 + $0x370] sm:$0xff]
          %v1918 = vld [vmem:[#allocation9 + $0x378] sm:$0xff]
          %v1919 = vld [vmem:[#allocation9 + $0x380] sm:$0xff]
          %v1920 = vld [vmem:[#allocation9 + $0x388] sm:$0xff]
          %v1921 = vld [vmem:[#allocation9 + $0x390] sm:$0xff]
          %v1922 = vld [vmem:[#allocation9 + $0x398] sm:$0xff]
          %v1923 = vld [vmem:[#allocation9 + $0x3a0] sm:$0xff]
          %v1924 = vld [vmem:[#allocation9 + $0x3a8] sm:$0xff]
          %v1925 = vld [vmem:[#allocation9 + $0x3b0] sm:$0xff]
          %v1926 = vld [vmem:[#allocation9 + $0x3b8] sm:$0xff]
          %v1927 = vld [vmem:[#allocation9 + $0x3c0] sm:$0xff]
          %v1928 = vld [vmem:[#allocation9 + $0x3c8] sm:$0xff]
          %v1929 = vld [vmem:[#allocation9 + $0x3d0] sm:$0xff]
          %v1930 = vld [vmem:[#allocation9 + $0x3d8] sm:$0xff]
          %v1931 = vld [vmem:[#allocation9 + $0x3e0] sm:$0xff]
          %v1932 = vld [vmem:[#allocation9 + $0x3e8] sm:$0xff]
          %v1933 = vld [vmem:[#allocation9 + $0x3f0] sm:$0xff]
          %v1934 = vld [vmem:[#allocation9 + $0x3f8] sm:$0xff]
          %v1935 = vld [vmem:[#allocation9 + $0x400] sm:$0xff]
          %v1936 = vld [vmem:[#allocation9 + $0x408] sm:$0xff]
          %v1937 = vld [vmem:[#allocation9 + $0x410] sm:$0xff]
          %v1938 = vld [vmem:[#allocation9 + $0x418] sm:$0xff]
          %v1939 = vld [vmem:[#allocation9 + $0x420] sm:$0xff]
          %v1940 = vld [vmem:[#allocation9 + $0x428] sm:$0xff]
          %v1941 = vld [vmem:[#allocation9 + $0x430] sm:$0xff]
          %v1942 = vld [vmem:[#allocation9 + $0x438] sm:$0xff]
          %v1943 = vld [vmem:[#allocation9 + $0x440] sm:$0xff]
          %v1944 = vld [vmem:[#allocation9 + $0x448] sm:$0xff]
          %v1945 = vld [vmem:[#allocation9 + $0x450] sm:$0xff]
          %v1946 = vld [vmem:[#allocation9 + $0x458] sm:$0xff]
          %v1947 = vld [vmem:[#allocation9 + $0x460] sm:$0xff]
          %v1948 = vld [vmem:[#allocation9 + $0x468] sm:$0xff]
          %v1949 = vld [vmem:[#allocation9 + $0x470] sm:$0xff]
          %v1950 = vld [vmem:[#allocation9 + $0x478] sm:$0xff]
          %v1951 = vld [vmem:[#allocation9 + $0x480] sm:$0xff]
          %v1952 = vld [vmem:[#allocation9 + $0x488] sm:$0xff]
          %v1953 = vld [vmem:[#allocation9 + $0x490] sm:$0xff]
          %v1954 = vld [vmem:[#allocation9 + $0x498] sm:$0xff]
          %v1955 = vld [vmem:[#allocation9 + $0x4a0] sm:$0xff]
          %v1956 = vld [vmem:[#allocation9 + $0x4a8] sm:$0xff]
          %v1957 = vld [vmem:[#allocation9 + $0x4b0] sm:$0xff]
          %v1958 = vld [vmem:[#allocation9 + $0x4b8] sm:$0xff]
          %v1959 = vld [vmem:[#allocation9 + $0x4c0] sm:$0xff]
          %v1960 = vld [vmem:[#allocation9 + $0x4c8] sm:$0xff]
          %v1961 = vld [vmem:[#allocation9 + $0x4d0] sm:$0xff]
          %v1962 = vld [vmem:[#allocation9 + $0x4d8] sm:$0xff]
          %v1963 = vld [vmem:[#allocation9 + $0x4e0] sm:$0xff]
          %v1964 = vld [vmem:[#allocation9 + $0x4e8] sm:$0xff]
          %v1965 = vld [vmem:[#allocation9 + $0x4f0] sm:$0xff]
          %v1966 = vld [vmem:[#allocation9 + $0x4f8] sm:$0xff]
          %v1967 = vld [vmem:[#allocation11] sm:$0x1]
          %v1969 = vlaneseq
          %v1970 = vshrl.u32 %v1969, 7
          %v1971 = vsub.s32 0, %v1970
          %v1972 = vrot.slane %v1967, %v1971
          %1974 = vmatprep.subr.mxu0 0.0
          %1975 = vmatpush1.msra.mxu0 %v1807
          %1976 = vmatprep.subr.mxu0 0.0
          %1977 = vmatpush1.msra.mxu0 %v1808
          %1978 = vmatprep.subr.mxu0 0.0
          %1979 = vmatpush1.msra.mxu0 %v1809
          %1980 = vmatprep.subr.mxu0 0.0
          %1981 = vmatpush1.msra.mxu0 %v1810
          %1982 = vmatprep.subr.mxu0 0.0
          %1983 = vmatpush1.msra.mxu0 %v1811
          %1984 = vmatprep.subr.mxu0 0.0
          %1985 = vmatpush1.msra.mxu0 %v1812
          %1986 = vmatprep.subr.mxu0 0.0
          %1987 = vmatpush1.msra.mxu0 %v1813
          %1988 = vmatprep.subr.mxu0 0.0
          %1989 = vmatpush1.msra.mxu0 %v1814
          %1990 = vmatprep.subr.mxu0 0.0
          %1991 = vmatpush1.msra.mxu0 %v1815
          %1992 = vmatprep.subr.mxu0 0.0
          %1993 = vmatpush1.msra.mxu0 %v1816
          %1994 = vmatprep.subr.mxu0 0.0
          %1995 = vmatpush1.msra.mxu0 %v1817
          %1996 = vmatprep.subr.mxu0 0.0
          %1997 = vmatpush1.msra.mxu0 %v1818
          %1998 = vmatprep.subr.mxu0 0.0
          %1999 = vmatpush1.msra.mxu0 %v1819
          %2000 = vmatprep.subr.mxu0 0.0
          %2001 = vmatpush1.msra.mxu0 %v1820
          %2002 = vmatprep.subr.mxu0 0.0
          %2003 = vmatpush1.msra.mxu0 %v1821
          %2004 = vmatprep.subr.mxu0 0.0
          %2005 = vmatpush1.msra.mxu0 %v1822
          %2006 = vmatprep.subr.mxu0 0.0
          %2007 = vmatpush1.msra.mxu0 %v1823
          %2008 = vmatprep.subr.mxu0 0.0
          %2009 = vmatpush1.msra.mxu0 %v1824
          %2010 = vmatprep.subr.mxu0 0.0
          %2011 = vmatpush1.msra.mxu0 %v1825
          %2012 = vmatprep.subr.mxu0 0.0
          %2013 = vmatpush1.msra.mxu0 %v1826
          %2014 = vmatprep.subr.mxu0 0.0
          %2015 = vmatpush1.msra.mxu0 %v1827
          %2016 = vmatprep.subr.mxu0 0.0
          %2017 = vmatpush1.msra.mxu0 %v1828
          %2018 = vmatprep.subr.mxu0 0.0
          %2019 = vmatpush1.msra.mxu0 %v1829
          %2020 = vmatprep.subr.mxu0 0.0
          %2021 = vmatpush1.msra.mxu0 %v1830
          %2022 = vmatprep.subr.mxu0 0.0
          %2023 = vmatpush1.msra.mxu0 %v1831
          %2024 = vmatprep.subr.mxu0 0.0
          %2025 = vmatpush1.msra.mxu0 %v1832
          %2026 = vmatprep.subr.mxu0 0.0
          %2027 = vmatpush1.msra.mxu0 %v1833
          %2028 = vmatprep.subr.mxu0 0.0
          %2029 = vmatpush1.msra.mxu0 %v1834
          %2030 = vmatprep.subr.mxu0 0.0
          %2031 = vmatpush1.msra.mxu0 %v1835
          %2032 = vmatprep.subr.mxu0 0.0
          %2033 = vmatpush1.msra.mxu0 %v1836
          %2034 = vmatprep.subr.mxu0 0.0
          %2035 = vmatpush1.msra.mxu0 %v1837
          %2036 = vmatprep.subr.mxu0 0.0
          %2037 = vmatpush1.msra.mxu0 %v1838
          %2038 = vmatprep.mubr.f32.mxu0 %v1788
          %2039 = vmatmul.mubr.f32.gmra.mrb[0].mxu0 %v1787
          %v2040 = vpop.f32.mrb[0].mxu0
          %v2041 = vadd.f32 %v1972, %v2040
          %v2042 = vpop.f32.mrb[0].mxu0
          %2043 = vmatprep.mubr.f32.mxu0 %v1798
          %2044 = vmatmul.mubr.f32.gmra.mrb[0].mxu0 %v1797
          %v2045 = vpop.f32.mrb[0].mxu0
          %v2046 = vadd.f32 %v1972, %v2045
          %v2047 = vpop.f32.mrb[0].mxu0
          %2048 = vdwg.mxu0
          %2049 = vmatprep.subr.mxu0 0.0
          %2050 = vmatpush1.msra.mxu0 %v1839
          %2051 = vmatprep.subr.mxu0 0.0
          %2052 = vmatpush1.msra.mxu0 %v1840
          %2053 = vmatprep.subr.mxu0 0.0
          %2054 = vmatpush1.msra.mxu0 %v1841
          %2055 = vmatprep.subr.mxu0 0.0
          %2056 = vmatpush1.msra.mxu0 %v1842
          %2057 = vmatprep.subr.mxu0 0.0
          %2058 = vmatpush1.msra.mxu0 %v1843
          %2059 = vmatprep.subr.mxu0 0.0
          %2060 = vmatpush1.msra.mxu0 %v1844
          %2061 = vmatprep.subr.mxu0 0.0
          %2062 = vmatpush1.msra.mxu0 %v1845
          %2063 = vmatprep.subr.mxu0 0.0
          %2064 = vmatpush1.msra.mxu0 %v1846
          %2065 = vmatprep.subr.mxu0 0.0
          %2066 = vmatpush1.msra.mxu0 %v1847
          %2067 = vmatprep.subr.mxu0 0.0
          %2068 = vmatpush1.msra.mxu0 %v1848
          %2069 = vmatprep.subr.mxu0 0.0
          %2070 = vmatpush1.msra.mxu0 %v1849
          %2071 = vmatprep.subr.mxu0 0.0
          %2072 = vmatpush1.msra.mxu0 %v1850
          %2073 = vmatprep.subr.mxu0 0.0
          %2074 = vmatpush1.msra.mxu0 %v1851
          %2075 = vmatprep.subr.mxu0 0.0
          %2076 = vmatpush1.msra.mxu0 %v1852
          %2077 = vmatprep.subr.mxu0 0.0
          %2078 = vmatpush1.msra.mxu0 %v1853
          %2079 = vmatprep.subr.mxu0 0.0
          %2080 = vmatpush1.msra.mxu0 %v1854
          %2081 = vmatprep.subr.mxu0 0.0
          %2082 = vmatpush1.msra.mxu0 %v1855
          %2083 = vmatprep.subr.mxu0 0.0
          %2084 = vmatpush1.msra.mxu0 %v1856
          %2085 = vmatprep.subr.mxu0 0.0
          %2086 = vmatpush1.msra.mxu0 %v1857
          %2087 = vmatprep.subr.mxu0 0.0
          %2088 = vmatpush1.msra.mxu0 %v1858
          %2089 = vmatprep.subr.mxu0 0.0
          %2090 = vmatpush1.msra.mxu0 %v1859
          %2091 = vmatprep.subr.mxu0 0.0
          %2092 = vmatpush1.msra.mxu0 %v1860
          %2093 = vmatprep.subr.mxu0 0.0
          %2094 = vmatpush1.msra.mxu0 %v1861
          %2095 = vmatprep.subr.mxu0 0.0
          %2096 = vmatpush1.msra.mxu0 %v1862
          %2097 = vmatprep.subr.mxu0 0.0
          %2098 = vmatpush1.msra.mxu0 %v1863
          %2099 = vmatprep.subr.mxu0 0.0
          %2100 = vmatpush1.msra.mxu0 %v1864
          %2101 = vmatprep.subr.mxu0 0.0
          %2102 = vmatpush1.msra.mxu0 %v1865
          %2103 = vmatprep.subr.mxu0 0.0
          %2104 = vmatpush1.msra.mxu0 %v1866
          %2105 = vmatprep.subr.mxu0 0.0
          %2106 = vmatpush1.msra.mxu0 %v1867
          %2107 = vmatprep.subr.mxu0 0.0
          %2108 = vmatpush1.msra.mxu0 %v1868
          %2109 = vmatprep.subr.mxu0 0.0
          %2110 = vmatpush1.msra.mxu0 %v1869
          %2111 = vmatprep.subr.mxu0 0.0
          %2112 = vmatpush1.msra.mxu0 %v1870
          %2113 = vmatprep.mubr.f32.mxu0 %v1790
          %2114 = vmatmul.mubr.f32.gmra.mrb[0].mxu0 %v1789
          %v2115 = vpop.f32.mrb[0].mxu0
          %v2116 = vadd.f32 %v2041, %v2115
          %v2117 = vpop.f32.mrb[0].mxu0
          %2118 = vmatprep.mubr.f32.mxu0 %v1800
          %2119 = vmatmul.mubr.f32.gmra.mrb[0].mxu0 %v1799
          %v2120 = vpop.f32.mrb[0].mxu0
          %v2121 = vadd.f32 %v2046, %v2120
          %v2122 = vpop.f32.mrb[0].mxu0
          %2123 = vdwg.mxu0
          %2124 = vmatprep.subr.mxu0 0.0
          %2125 = vmatpush1.msra.mxu0 %v1871
          %2126 = vmatprep.subr.mxu0 0.0
          %2127 = vmatpush1.msra.mxu0 %v1872
          %2128 = vmatprep.subr.mxu0 0.0
          %2129 = vmatpush1.msra.mxu0 %v1873
          %2130 = vmatprep.subr.mxu0 0.0
          %2131 = vmatpush1.msra.mxu0 %v1874
          %2132 = vmatprep.subr.mxu0 0.0
          %2133 = vmatpush1.msra.mxu0 %v1875
          %2134 = vmatprep.subr.mxu0 0.0
          %2135 = vmatpush1.msra.mxu0 %v1876
          %2136 = vmatprep.subr.mxu0 0.0
          %2137 = vmatpush1.msra.mxu0 %v1877
          %2138 = vmatprep.subr.mxu0 0.0
          %2139 = vmatpush1.msra.mxu0 %v1878
          %2140 = vmatprep.subr.mxu0 0.0
          %2141 = vmatpush1.msra.mxu0 %v1879
          %2142 = vmatprep.subr.mxu0 0.0
          %2143 = vmatpush1.msra.mxu0 %v1880
          %2144 = vmatprep.subr.mxu0 0.0
          %2145 = vmatpush1.msra.mxu0 %v1881
          %2146 = vmatprep.subr.mxu0 0.0
          %2147 = vmatpush1.msra.mxu0 %v1882
          %2148 = vmatprep.subr.mxu0 0.0
          %2149 = vmatpush1.msra.mxu0 %v1883
          %2150 = vmatprep.subr.mxu0 0.0
          %2151 = vmatpush1.msra.mxu0 %v1884
          %2152 = vmatprep.subr.mxu0 0.0
          %2153 = vmatpush1.msra.mxu0 %v1885
          %2154 = vmatprep.subr.mxu0 0.0
          %2155 = vmatpush1.msra.mxu0 %v1886
          %2156 = vmatprep.subr.mxu0 0.0
          %2157 = vmatpush1.msra.mxu0 %v1887
          %2158 = vmatprep.subr.mxu0 0.0
          %2159 = vmatpush1.msra.mxu0 %v1888
          %2160 = vmatprep.subr.mxu0 0.0
          %2161 = vmatpush1.msra.mxu0 %v1889
          %2162 = vmatprep.subr.mxu0 0.0
          %2163 = vmatpush1.msra.mxu0 %v1890
          %2164 = vmatprep.subr.mxu0 0.0
          %2165 = vmatpush1.msra.mxu0 %v1891
          %2166 = vmatprep.subr.mxu0 0.0
          %2167 = vmatpush1.msra.mxu0 %v1892
          %2168 = vmatprep.subr.mxu0 0.0
          %2169 = vmatpush1.msra.mxu0 %v1893
          %2170 = vmatprep.subr.mxu0 0.0
          %2171 = vmatpush1.msra.mxu0 %v1894
          %2172 = vmatprep.subr.mxu0 0.0
          %2173 = vmatpush1.msra.mxu0 %v1895
          %2174 = vmatprep.subr.mxu0 0.0
          %2175 = vmatpush1.msra.mxu0 %v1896
          %2176 = vmatprep.subr.mxu0 0.0
          %2177 = vmatpush1.msra.mxu0 %v1897
          %2178 = vmatprep.subr.mxu0 0.0
          %2179 = vmatpush1.msra.mxu0 %v1898
          %2180 = vmatprep.subr.mxu0 0.0
          %2181 = vmatpush1.msra.mxu0 %v1899
          %2182 = vmatprep.subr.mxu0 0.0
          %2183 = vmatpush1.msra.mxu0 %v1900
          %2184 = vmatprep.subr.mxu0 0.0
          %2185 = vmatpush1.msra.mxu0 %v1901
          %2186 = vmatprep.subr.mxu0 0.0
          %2187 = vmatpush1.msra.mxu0 %v1902
          %2188 = vmatprep.mubr.f32.mxu0 %v1792
          %2189 = vmatmul.mubr.f32.gmra.mrb[0].mxu0 %v1791
          %v2190 = vpop.f32.mrb[0].mxu0
          %v2191 = vadd.f32 %v2116, %v2190
          %v2192 = vpop.f32.mrb[0].mxu0
          %2193 = vmatprep.mubr.f32.mxu0 %v1802
          %2194 = vmatmul.mubr.f32.gmra.mrb[0].mxu0 %v1801
          %v2195 = vpop.f32.mrb[0].mxu0
          %v2196 = vadd.f32 %v2121, %v2195
          %v2197 = vpop.f32.mrb[0].mxu0
          %2198 = vdwg.mxu0
          %2199 = vmatprep.subr.mxu0 0.0
          %2200 = vmatpush1.msra.mxu0 %v1903
          %2201 = vmatprep.subr.mxu0 0.0
          %2202 = vmatpush1.msra.mxu0 %v1904
          %2203 = vmatprep.subr.mxu0 0.0
          %2204 = vmatpush1.msra.mxu0 %v1905
          %2205 = vmatprep.subr.mxu0 0.0
          %2206 = vmatpush1.msra.mxu0 %v1906
          %2207 = vmatprep.subr.mxu0 0.0
          %2208 = vmatpush1.msra.mxu0 %v1907
          %2209 = vmatprep.subr.mxu0 0.0
          %2210 = vmatpush1.msra.mxu0 %v1908
          %2211 = vmatprep.subr.mxu0 0.0
          %2212 = vmatpush1.msra.mxu0 %v1909
          %2213 = vmatprep.subr.mxu0 0.0
          %2214 = vmatpush1.msra.mxu0 %v1910
          %2215 = vmatprep.subr.mxu0 0.0
          %2216 = vmatpush1.msra.mxu0 %v1911
          %2217 = vmatprep.subr.mxu0 0.0
          %2218 = vmatpush1.msra.mxu0 %v1912
          %2219 = vmatprep.subr.mxu0 0.0
          %2220 = vmatpush1.msra.mxu0 %v1913
          %2221 = vmatprep.subr.mxu0 0.0
          %2222 = vmatpush1.msra.mxu0 %v1914
          %2223 = vmatprep.subr.mxu0 0.0
          %2224 = vmatpush1.msra.mxu0 %v1915
          %2225 = vmatprep.subr.mxu0 0.0
          %2226 = vmatpush1.msra.mxu0 %v1916
          %2227 = vmatprep.subr.mxu0 0.0
          %2228 = vmatpush1.msra.mxu0 %v1917
          %2229 = vmatprep.subr.mxu0 0.0
          %2230 = vmatpush1.msra.mxu0 %v1918
          %2231 = vmatprep.subr.mxu0 0.0
          %2232 = vmatpush1.msra.mxu0 %v1919
          %2233 = vmatprep.subr.mxu0 0.0
          %2234 = vmatpush1.msra.mxu0 %v1920
          %2235 = vmatprep.subr.mxu0 0.0
          %2236 = vmatpush1.msra.mxu0 %v1921
          %2237 = vmatprep.subr.mxu0 0.0
          %2238 = vmatpush1.msra.mxu0 %v1922
          %2239 = vmatprep.subr.mxu0 0.0
          %2240 = vmatpush1.msra.mxu0 %v1923
          %2241 = vmatprep.subr.mxu0 0.0
          %2242 = vmatpush1.msra.mxu0 %v1924
          %2243 = vmatprep.subr.mxu0 0.0
          %2244 = vmatpush1.msra.mxu0 %v1925
          %2245 = vmatprep.subr.mxu0 0.0
          %2246 = vmatpush1.msra.mxu0 %v1926
          %2247 = vmatprep.subr.mxu0 0.0
          %2248 = vmatpush1.msra.mxu0 %v1927
          %2249 = vmatprep.subr.mxu0 0.0
          %2250 = vmatpush1.msra.mxu0 %v1928
          %2251 = vmatprep.subr.mxu0 0.0
          %2252 = vmatpush1.msra.mxu0 %v1929
          %2253 = vmatprep.subr.mxu0 0.0
          %2254 = vmatpush1.msra.mxu0 %v1930
          %2255 = vmatprep.subr.mxu0 0.0
          %2256 = vmatpush1.msra.mxu0 %v1931
          %2257 = vmatprep.subr.mxu0 0.0
          %2258 = vmatpush1.msra.mxu0 %v1932
          %2259 = vmatprep.subr.mxu0 0.0
          %2260 = vmatpush1.msra.mxu0 %v1933
          %2261 = vmatprep.subr.mxu0 0.0
          %2262 = vmatpush1.msra.mxu0 %v1934
          %2263 = vmatprep.mubr.f32.mxu0 %v1794
          %2264 = vmatmul.mubr.f32.gmra.mrb[0].mxu0 %v1793
          %v2265 = vpop.f32.mrb[0].mxu0
          %v2266 = vadd.f32 %v2191, %v2265
          %v2267 = vpop.f32.mrb[0].mxu0
          %2268 = vmatprep.mubr.f32.mxu0 %v1804
          %2269 = vmatmul.mubr.f32.gmra.mrb[0].mxu0 %v1803
          %v2270 = vpop.f32.mrb[0].mxu0
          %v2271 = vadd.f32 %v2196, %v2270
          %v2272 = vpop.f32.mrb[0].mxu0
          %2273 = vdwg.mxu0
          %2274 = vmatprep.subr.mxu0 0.0
          %2275 = vmatpush1.msra.mxu0 %v1935
          %2276 = vmatprep.subr.mxu0 0.0
          %2277 = vmatpush1.msra.mxu0 %v1936
          %2278 = vmatprep.subr.mxu0 0.0
          %2279 = vmatpush1.msra.mxu0 %v1937
          %2280 = vmatprep.subr.mxu0 0.0
          %2281 = vmatpush1.msra.mxu0 %v1938
          %2282 = vmatprep.subr.mxu0 0.0
          %2283 = vmatpush1.msra.mxu0 %v1939
          %2284 = vmatprep.subr.mxu0 0.0
          %2285 = vmatpush1.msra.mxu0 %v1940
          %2286 = vmatprep.subr.mxu0 0.0
          %2287 = vmatpush1.msra.mxu0 %v1941
          %2288 = vmatprep.subr.mxu0 0.0
          %2289 = vmatpush1.msra.mxu0 %v1942
          %2290 = vmatprep.subr.mxu0 0.0
          %2291 = vmatpush1.msra.mxu0 %v1943
          %2292 = vmatprep.subr.mxu0 0.0
          %2293 = vmatpush1.msra.mxu0 %v1944
          %2294 = vmatprep.subr.mxu0 0.0
          %2295 = vmatpush1.msra.mxu0 %v1945
          %2296 = vmatprep.subr.mxu0 0.0
          %2297 = vmatpush1.msra.mxu0 %v1946
          %2298 = vmatprep.subr.mxu0 0.0
          %2299 = vmatpush1.msra.mxu0 %v1947
          %2300 = vmatprep.subr.mxu0 0.0
          %2301 = vmatpush1.msra.mxu0 %v1948
          %2302 = vmatprep.subr.mxu0 0.0
          %2303 = vmatpush1.msra.mxu0 %v1949
          %2304 = vmatprep.subr.mxu0 0.0
          %2305 = vmatpush1.msra.mxu0 %v1950
          %2306 = vmatprep.subr.mxu0 0.0
          %2307 = vmatpush1.msra.mxu0 %v1951
          %2308 = vmatprep.subr.mxu0 0.0
          %2309 = vmatpush1.msra.mxu0 %v1952
          %2310 = vmatprep.subr.mxu0 0.0
          %2311 = vmatpush1.msra.mxu0 %v1953
          %2312 = vmatprep.subr.mxu0 0.0
          %2313 = vmatpush1.msra.mxu0 %v1954
          %2314 = vmatprep.subr.mxu0 0.0
          %2315 = vmatpush1.msra.mxu0 %v1955
          %2316 = vmatprep.subr.mxu0 0.0
          %2317 = vmatpush1.msra.mxu0 %v1956
          %2318 = vmatprep.subr.mxu0 0.0
          %2319 = vmatpush1.msra.mxu0 %v1957
          %2320 = vmatprep.subr.mxu0 0.0
          %2321 = vmatpush1.msra.mxu0 %v1958
          %2322 = vmatprep.subr.mxu0 0.0
          %2323 = vmatpush1.msra.mxu0 %v1959
          %2324 = vmatprep.subr.mxu0 0.0
          %2325 = vmatpush1.msra.mxu0 %v1960
          %2326 = vmatprep.subr.mxu0 0.0
          %2327 = vmatpush1.msra.mxu0 %v1961
          %2328 = vmatprep.subr.mxu0 0.0
          %2329 = vmatpush1.msra.mxu0 %v1962
          %2330 = vmatprep.subr.mxu0 0.0
          %2331 = vmatpush1.msra.mxu0 %v1963
          %2332 = vmatprep.subr.mxu0 0.0
          %2333 = vmatpush1.msra.mxu0 %v1964
          %2334 = vmatprep.subr.mxu0 0.0
          %2335 = vmatpush1.msra.mxu0 %v1965
          %2336 = vmatprep.subr.mxu0 0.0
          %2337 = vmatpush1.msra.mxu0 %v1966
          %2338 = vmatprep.mubr.f32.mxu0 %v1796
          %2339 = vmatmul.mubr.f32.gmra.mrb[0].mxu0 %v1795
          %v2340 = vpop.f32.mrb[0].mxu0
          %v2341 = vadd.f32 %v2266, %v2340
          %v2342 = vpop.f32.mrb[0].mxu0
          %2343 = vmatprep.mubr.f32.mxu0 %v1806
          %2344 = vmatmul.mubr.f32.gmra.mrb[0].mxu0 %v1805
          %v2345 = vpop.f32.mrb[0].mxu0
          %v2346 = vadd.f32 %v2271, %v2345
          %v2347 = vpop.f32.mrb[0].mxu0
          %2348 = vdwg.mxu0
          %v2349 = vmax.f32 %v2341, 0.0
          %v2350 = vmax.f32 %v2346, 0.0
          %v2351 = vld [vmem:[#allocation12] sm:$0xff]
          %v2352 = vld [vmem:[#allocation12 + $0x8] sm:$0xff]
          %v2353 = vld [vmem:[#allocation12 + $0x10] sm:$0xff]
          %v2354 = vld [vmem:[#allocation12 + $0x18] sm:$0xff]
          %v2355 = vld [vmem:[#allocation12 + $0x20] sm:$0xff]
          %v2356 = vld [vmem:[#allocation12 + $0x28] sm:$0xff]
          %v2357 = vld [vmem:[#allocation12 + $0x30] sm:$0xff]
          %v2358 = vld [vmem:[#allocation12 + $0x38] sm:$0xff]
          %v2359 = vld [vmem:[#allocation12 + $0x40] sm:$0xff]
          %v2360 = vld [vmem:[#allocation12 + $0x48] sm:$0xff]
          %v2361 = vld [vmem:[#allocation12 + $0x50] sm:$0xff]
          %v2362 = vld [vmem:[#allocation12 + $0x58] sm:$0xff]
          %v2363 = vld [vmem:[#allocation12 + $0x60] sm:$0xff]
          %v2364 = vld [vmem:[#allocation12 + $0x68] sm:$0xff]
          %v2365 = vld [vmem:[#allocation12 + $0x70] sm:$0xff]
          %v2366 = vld [vmem:[#allocation12 + $0x78] sm:$0xff]
          %v2367 = vld [vmem:[#allocation14] sm:$0x1]
          %v2369 = vlaneseq
          %v2370 = vshrl.u32 %v2369, 7
          %v2371 = vsub.s32 0, %v2370
          %v2372 = vrot.slane %v2367, %v2371
          %2374 = vmatprep.subr.mxu0 0.0
          %2375 = vmatpush1.msra.mxu0 %v2351
          %2376 = vmatprep.subr.mxu0 0.0
          %2377 = vmatpush1.msra.mxu0 %v2352
          %2378 = vmatprep.subr.mxu0 0.0
          %2379 = vmatpush1.msra.mxu0 %v2353
          %2380 = vmatprep.subr.mxu0 0.0
          %2381 = vmatpush1.msra.mxu0 %v2354
          %2382 = vmatprep.subr.mxu0 0.0
          %2383 = vmatpush1.msra.mxu0 %v2355
          %2384 = vmatprep.subr.mxu0 0.0
          %2385 = vmatpush1.msra.mxu0 %v2356
          %2386 = vmatprep.subr.mxu0 0.0
          %2387 = vmatpush1.msra.mxu0 %v2357
          %2388 = vmatprep.subr.mxu0 0.0
          %2389 = vmatpush1.msra.mxu0 %v2358
          %2390 = vmatprep.subr.mxu0 0.0
          %2391 = vmatpush1.msra.mxu0 %v2359
          %2392 = vmatprep.subr.mxu0 0.0
          %2393 = vmatpush1.msra.mxu0 %v2360
          %2394 = vmatprep.subr.mxu0 0.0
          %2395 = vmatpush1.msra.mxu0 %v2361
          %2396 = vmatprep.subr.mxu0 0.0
          %2397 = vmatpush1.msra.mxu0 %v2362
          %2398 = vmatprep.subr.mxu0 0.0
          %2399 = vmatpush1.msra.mxu0 %v2363
          %2400 = vmatprep.subr.mxu0 0.0
          %2401 = vmatpush1.msra.mxu0 %v2364
          %2402 = vmatprep.subr.mxu0 0.0
          %2403 = vmatpush1.msra.mxu0 %v2365
          %2404 = vmatprep.subr.mxu0 0.0
          %2405 = vmatpush1.msra.mxu0 %v2366
          %2406 = vmatprep.subr.mxu0 0.0
          %2407 = vmatpush1.msra.mxu0 0.0
          %2408 = vmatprep.subr.mxu0 0.0
          %2409 = vmatpush1.msra.mxu0 0.0
          %2410 = vmatprep.subr.mxu0 0.0
          %2411 = vmatpush1.msra.mxu0 0.0
          %2412 = vmatprep.subr.mxu0 0.0
          %2413 = vmatpush1.msra.mxu0 0.0
          %2414 = vmatprep.subr.mxu0 0.0
          %2415 = vmatpush1.msra.mxu0 0.0
          %2416 = vmatprep.subr.mxu0 0.0
          %2417 = vmatpush1.msra.mxu0 0.0
          %2418 = vmatprep.subr.mxu0 0.0
          %2419 = vmatpush1.msra.mxu0 0.0
          %2420 = vmatprep.subr.mxu0 0.0
          %2421 = vmatpush1.msra.mxu0 0.0
          %2422 = vmatprep.subr.mxu0 0.0
          %2423 = vmatpush1.msra.mxu0 0.0
          %2424 = vmatprep.subr.mxu0 0.0
          %2425 = vmatpush1.msra.mxu0 0.0
          %2426 = vmatprep.subr.mxu0 0.0
          %2427 = vmatpush1.msra.mxu0 0.0
          %2428 = vmatprep.subr.mxu0 0.0
          %2429 = vmatpush1.msra.mxu0 0.0
          %2430 = vmatprep.subr.mxu0 0.0
          %2431 = vmatpush1.msra.mxu0 0.0
          %2432 = vmatprep.subr.mxu0 0.0
          %2433 = vmatpush1.msra.mxu0 0.0
          %2434 = vmatprep.subr.mxu0 0.0
          %2435 = vmatpush1.msra.mxu0 0.0
          %2436 = vmatprep.subr.mxu0 0.0
          %2437 = vmatpush1.msra.mxu0 0.0
          %2438 = vmatprep.mubr.f32.mxu0 0.0
          %2439 = vmatmul.mubr.f32.gmra.mrb[0].mxu0 %v2349
          %v2440 = vpop.f32.mrb[0].mxu0
          %v2441 = vadd.f32 %v2372, %v2440
          %v2442 = vpop.f32.mrb[0].mxu0
          %2443 = vmatprep.mubr.f32.mxu0 0.0
          %2444 = vmatmul.mubr.f32.gmra.mrb[0].mxu0 %v2350
          %v2445 = vpop.f32.mrb[0].mxu0
          %v2446 = vadd.f32 %v2372, %v2445
          %v2447 = vpop.f32.mrb[0].mxu0
          %2448 = vdwg.mxu0
          %2449 = vst [vmem:[#allocation15] sm:$0xff] %v2441
          %2450 = vst [vmem:[#allocation15 + $0x8] sm:$0xff] %v2446
        $region84: #{_run_fused.1} parent=47 // pred_fallthru
          _
        // Predicated region
        $region85: #{_run_fused.1} parent=47 // pred_check
          %p2451 = pneg %p216
        $region86: #{_run_fused.1} parent=47 // pred_check_branch
          %2453 = sbr.rel (%p2451) target = $region88
        $region87: #{_run_fused.1} parent=47 // pred_region
          %s2454 = smul.u32 2, %s31
          %s2456 = ssub.s32 256, 256
          %2457 = vsyncadd [#allocation5], %s2456
          %s2458 = smul.addr %s2454, 128
          %s2459 = scalar_lea.hbm %s7, %s2458
          %s2460 = sshll.u32 [#allocation15], 4
          %s2461 = int_to_ptr.vmem [resolvable:$true] %s2460
          %2466 = dma.vmem_to_hbm [thread:$0]  %s2461, 256, %s2459, [#allocation5], 128, 128, 8
        $region88: #{_run_fused.1} parent=47 // pred_fallthru
          _
        // Predicated region
        $region89: #{_run_fused.1} parent=47 // pred_check
          %p2467 = pneg %p216
        $region90: #{_run_fused.1} parent=47 // pred_check_branch
          %2469 = sbr.rel (%p2467) target = $region92
        $region91: #{_run_fused.1} parent=47 // pred_region
          %2470 = dma.done [#allocation5], 256
        $region92: #{_run_fused.1} parent=47 // pred_fallthru
          _
      $region48: #{_run_fused.1} parent=5 // pred_fallthru
        _
      %p2471 = scmp.le.s32.totalorder 2, %s22
      // Predicated region
      $region93: #{_run_fused.1} parent=5 // pred_check
        %p2472 = pneg %p2471
      $region94: #{_run_fused.1} parent=5 // pred_check_branch
        %2474 = sbr.rel (%p2472) target = $region96
      $region95: #{_run_fused.1} parent=5 // pred_region
        %s2475 = ssub.s32 %s22, 2
      $region96: #{_run_fused.1} parent=5 // pred_fallthru
        _
    $region6: #{_run_fused.1} parent=1 // loop_footer
      %s26 = sadd.s32 1, %s22
    $region7: #{_run_fused.1} parent=1 // loop_footer_branch
      %21 = sbr.rel target = $region3
    $region8: #{_run_fused.1} parent=1 // loop_exit
      _
    %2476 = vsyncpa [#allocation4], 1
    %s2477 = scalar_lea.sflag [#allocation4], 1
    %2478 = vsyncpa %s2477, 1
    %2479 = vsyncpa [#allocation7], 1
    %s2480 = scalar_lea.sflag [#allocation7], 1
    %2481 = vsyncpa %s2480, 1
    %2482 = vsyncpa [#allocation10], 1
    %2483 = vsyncpa [#allocation13], 1
    %2484 = vsyncpa [#allocation5], 1
    %s2485 = scalar_lea.sflag [#allocation5], 1
    %2486 = vsyncpa %s2485, 1

</llo_original>
